<compile_context>
chip_gen: v5e
topology: v5e:2x2
jax: 0.10.0
libtpu: 0.0.40
codegen_flags: <defaults>
</compile_context>

<pallas_src>
import jax
import jax.numpy as jnp
import numpy as np
from jax import lax
from jax.experimental import pallas as pl
from jax.experimental.pallas import tpu as pltpu


# ----------------------------------------------------------------------------
# Parameter prep
# ----------------------------------------------------------------------------
def fold_bn(gamma, beta, running_mean, running_var, eps=1e-5):
    scale = gamma / jnp.sqrt(running_var + eps)
    bias = beta - running_mean * scale
    return scale, bias


def _pack_weight(w, scale, compute_dtype):
    """HWIO (3,3,Cin,Cout) -> (Cout, 9*Cin) with BN scale folded, K = tap-major."""
    cin, cout = w.shape[2], w.shape[3]
    ws = w * scale[None, None, None, :]
    return jnp.transpose(ws, (3, 0, 1, 2)).reshape(cout, 9 * cin).astype(compute_dtype)


# ----------------------------------------------------------------------------
# Fused DoubleConv + Down kernel (one image per grid step)
# ----------------------------------------------------------------------------
def _make_downsample_kernel(H, W, Cmid, Cout):
    Ho, Wo = H // 2, W // 2
    Hq, Wq = Ho + 1, Wo + 1        # parity-component grid of the padded image
    Lq = Hq * Wq                   # flat length of one component
    base = Wq + 1                  # margin so every shifted tap slice is in-bounds
    Lqw = Lq + 2 * base

    def tap_plan_s1(P, Q):
        # 9 taps of a stride-1 / pad-1 conv producing output parity comp (P,Q):
        # tap (ky,kx) reads input component ((P+ky-1)%2, (Q+kx-1)%2) at a static
        # flat shift of floor((P+ky-1)/2)*Wq + floor((Q+kx-1)/2).
        plan = []
        for ky in range(3):
            for kx in range(3):
                a, b = P + ky - 1, Q + kx - 1
                comp = (a % 2) * 2 + (b % 2)
                delta = (a // 2) * Wq + (b // 2)
                plan.append((comp, delta))
        return plan

    TAPS_S1 = {(P, Q): tap_plan_s1(P, Q) for P in (0, 1) for Q in (0, 1)}
    # stride-2 conv: tap (ky,kx) reads component (ky%2, kx%2) shifted by
    # (ky//2, kx//2) on the component grid -> purely static flat shifts.
    TAPS_S2 = [((ky % 2) * 2 + (kx % 2), (ky // 2) * Wq + (kx // 2))
               for ky in range(3) for kx in range(3)]

    def kernel(xc_ref, mask_ref, w1_ref, b1_ref, w2_ref, b2_ref, w3_ref, b3_ref,
               x1_ref, x2_ref, s_mid, s_x1):
        # Zero the slice margins of the scratch pads every step (cheap; safe
        # under "parallel" grid semantics where step 0 may land on either core).
        for s_ref, c in ((s_mid, Cmid), (s_x1, Cout)):
            s_ref[:, :, 0:base] = jnp.zeros((4, c, base), s_ref.dtype)
            s_ref[:, :, base + Lq:Lqw] = jnp.zeros((4, c, base), s_ref.dtype)

        def conv_s1(load, w, b, P, Q):
            # K-packed conv: 9 shifted component windows -> one MXU dot.
            taps = [load(comp, delta) for comp, delta in TAPS_S1[(P, Q)]]
            acat = jnp.concatenate(taps, axis=0)                  # (9*Cin_, Lq)
            acc = jnp.dot(w, acat, preferred_element_type=jnp.float32)
            y = jnp.maximum(acc + b, 0.0)                         # bias + ReLU (f32)
            return y * mask_ref[P * 2 + Q]                        # zero padded border

        def load_in(comp, delta):
            return xc_ref[comp, :, base + delta:base + delta + Lq]

        def load_mid(comp, delta):
            return s_mid[comp, :, base + delta:base + delta + Lq]

        w1, b1 = w1_ref[...], b1_ref[...]
        w2, b2 = w2_ref[...], b2_ref[...]

        # conv1 + BN + ReLU  (DoubleConv, first half) -> bf16 VMEM resident.
        for P in (0, 1):
            for Q in (0, 1):
                y = conv_s1(load_in, w1, b1, P, Q)
                s_mid[P * 2 + Q, :, base:base + Lq] = y.astype(s_mid.dtype)

        # conv2 + BN + ReLU  (DoubleConv, second half) -> x1 output + VMEM resident.
        for P in (0, 1):
            for Q in (0, 1):
                y = conv_s1(load_mid, w2, b2, P, Q)
                x1_ref[P * 2 + Q, :, :] = y.astype(x1_ref.dtype)
                s_x1[P * 2 + Q, :, base:base + Lq] = y.astype(s_x1.dtype)

        # conv3 (stride-2 Down) + BN + ReLU, straight off the VMEM-resident x1.
        taps = [s_x1[comp, :, base + delta:base + delta + Ho * Wq]
                for comp, delta in TAPS_S2]
        acat = jnp.concatenate(taps, axis=0)                      # (9*Cout, Ho*Wq)
        acc = jnp.dot(w3_ref[...], acat, preferred_element_type=jnp.float32)
        y = jnp.maximum(acc + b3_ref[...], 0.0)                   # cols >= Wo are junk
        x2_ref[...] = y.astype(x2_ref.dtype)

    dims = dict(Ho=Ho, Wo=Wo, Hq=Hq, Wq=Wq, Lq=Lq, base=base, Lqw=Lqw)
    return kernel, dims


def downsample_forward(x, params, *, compute_dtype=jnp.bfloat16, out_dtype=None):
    """Fused DownSample forward.  x: (B, Cin, H, W) NCHW.  Returns (x1, x2) NCHW."""
    B, Cin, H, W = x.shape
    Cmid = params["w1"].shape[-1]
    Cout = params["w2"].shape[-1]
    assert params["w3"].shape[2] == Cout
    assert H % 2 == 0 and W % 2 == 0, "even H, W required (see TODO)"
    if out_dtype is None:
        out_dtype = x.dtype

    kernel, d = _make_downsample_kernel(H, W, Cmid, Cout)
    Ho, Wo, Hq, Wq, Lq, base, Lqw = (d[k] for k in
                                     ("Ho", "Wo", "Hq", "Wq", "Lq", "base", "Lqw"))
    Hp, Wp = H + 2, W + 2

    s1, b1 = fold_bn(*params["bn1"])
    s2, b2 = fold_bn(*params["bn2"])
    s3, b3 = fold_bn(*params["bn3"])
    w1 = _pack_weight(params["w1"], s1, compute_dtype)
    w2 = _pack_weight(params["w2"], s2, compute_dtype)
    w3 = _pack_weight(params["w3"], s3, compute_dtype)
    b1 = b1.reshape(Cmid, 1).astype(jnp.float32)
    b2 = b2.reshape(Cout, 1).astype(jnp.float32)
    b3 = b3.reshape(Cout, 1).astype(jnp.float32)

    # Parity (space-to-depth) decomposition of the zero-padded external input:
    # component (P,Q) holds padded pixels (2r+P, 2s+Q), flattened, with `base`
    # zero margins.  This is the only activation pass done outside the kernel.
    xpad = jnp.pad(x, ((0, 0), (0, 0), (1, 1), (1, 1))).astype(compute_dtype)
    comps = jnp.stack([xpad[:, :, P::2, Q::2] for P in (0, 1) for Q in (0, 1)],
                      axis=1).reshape(B, 4, Cin, Lq)
    xc = jnp.pad(comps, ((0, 0), (0, 0), (0, 0), (base, base)))     # (B,4,Cin,Lqw)

    # Interior mask per component (1 inside the HxW image, 0 on the pad border),
    # so each conv's output doubles as the next conv's zero-padded input.
    rr, ss = jnp.arange(Hq), jnp.arange(Wq)
    masks = []
    for P in (0, 1):
        for Q in (0, 1):
            rok = (2 * rr + P >= 1) & (2 * rr + P <= H)
            cok = (2 * ss + Q >= 1) & (2 * ss + Q <= W)
            masks.append((rok[:, None] & cok[None, :]).reshape(1, Lq))
    mask = jnp.stack(masks, axis=0).astype(jnp.float32)              # (4, 1, Lq)

    out_isize = jnp.dtype(out_dtype).itemsize
    flops = 2 * B * (H * W * 9 * Cin * Cmid + H * W * 9 * Cmid * Cout
                     + Ho * Wo * 9 * Cout * Cout)
    bytes_accessed = int(xc.size * 2 + mask.size * 4
                         + (w1.size + w2.size + w3.size) * 2
                         + (b1.size + b2.size + b3.size) * 4
                         + (B * 4 * Cout * Lq + B * Cout * Ho * Wq) * out_isize)

    x1c, x2f = pl.pallas_call(
        kernel,
        out_shape=(jax.ShapeDtypeStruct((B, 4, Cout, Lq), out_dtype),
                   jax.ShapeDtypeStruct((B, Cout, Ho * Wq), out_dtype)),
        grid=(B,),
        in_specs=[
            pl.BlockSpec((None, 4, Cin, Lqw), lambda b: (b, 0, 0, 0)),
            pl.BlockSpec((4, 1, Lq), lambda b: (0, 0, 0)),
            pl.BlockSpec((Cmid, 9 * Cin), lambda b: (0, 0)),
            pl.BlockSpec((Cmid, 1), lambda b: (0, 0)),
            pl.BlockSpec((Cout, 9 * Cmid), lambda b: (0, 0)),
            pl.BlockSpec((Cout, 1), lambda b: (0, 0)),
            pl.BlockSpec((Cout, 9 * Cout), lambda b: (0, 0)),
            pl.BlockSpec((Cout, 1), lambda b: (0, 0)),
        ],
        out_specs=[
            pl.BlockSpec((None, 4, Cout, Lq), lambda b: (b, 0, 0, 0)),
            pl.BlockSpec((None, Cout, Ho * Wq), lambda b: (b, 0, 0)),
        ],
        scratch_shapes=[
            pltpu.VMEM((4, Cmid, Lqw), compute_dtype),   # conv1 output (padded)
            pltpu.VMEM((4, Cout, Lqw), compute_dtype),   # x1 (padded), feeds Down
        ],
        compiler_params=pltpu.CompilerParams(
            dimension_semantics=("parallel",),
            vmem_limit_bytes=48 * 1024 * 1024),
        cost_estimate=pl.CostEstimate(flops=flops, transcendentals=0,
                                      bytes_accessed=bytes_accessed),
    )(xc, mask, w1, b1, w2, b2, w3, b3)

    # Reassemble x1 (NCHW) from its 4 parity components; crop x2's pad column.
    comps1 = x1c.reshape(B, 2, 2, Cout, Hq, Wq)
    x1pad = jnp.zeros((B, Cout, Hp, Wp), out_dtype)
    for P in (0, 1):
        for Q in (0, 1):
            x1pad = x1pad.at[:, :, P::2, Q::2].set(comps1[:, P, Q])
    x1 = x1pad[:, :, 1:H + 1, 1:W + 1]
    x2 = x2f.reshape(B, Cout, Ho, Wq)[:, :, :, :Wo]
    return x1, x2


# ----------------------------------------------------------------------------
# Pure-JAX reference (XLA conv, same bf16 casting) for the correctness check
# ----------------------------------------------------------------------------
def reference_forward(x, params, compute_dtype=jnp.bfloat16):
    def block(x, w, bn, stride):
        s, b = fold_bn(*bn)
        wf = (w * s[None, None, None, :]).astype(compute_dtype)
        y = lax.conv_general_dilated(
            x.astype(compute_dtype), wf, (stride, stride), ((1, 1), (1, 1)),
            dimension_numbers=("NCHW", "HWIO", "NCHW"),
            preferred_element_type=jnp.float32)
        return jnp.maximum(y + b[None, :, None, None], 0.0)

    x1 = block(x, params["w1"], params["bn1"], 1)
    x1 = block(x1, params["w2"], params["bn2"], 1)
    x2 = block(x1, params["w3"], params["bn3"], 2)
    return x1, x2


def make_params(key, in_channels, out_channels):
    ks = jax.random.split(key, 6)

    def bn(k, c):
        k1, k2 = jax.random.split(k)
        gamma = 1.0 + 0.05 * jax.random.normal(k1, (c,), jnp.float32)
        beta = 0.05 * jax.random.normal(k2, (c,), jnp.float32)
        mean = jnp.zeros((c,), jnp.float32)      # PyTorch running_mean default
        var = jnp.ones((c,), jnp.float32)        # PyTorch running_var default
        return (gamma, beta, mean, var)

    return {
        # HWIO weights (PyTorch Conv2d is OIHW; converted at construction time)
        "w1": 0.1 * jax.random.normal(ks[0], (3, 3, in_channels, out_channels),
                                      jnp.float32),
        "w2": 0.1 * jax.random.normal(ks[1], (3, 3, out_channels, out_channels),
                                      jnp.float32),
        "w3": 0.1 * jax.random.normal(ks[2], (3, 3, out_channels, out_channels),
                                      jnp.float32),
        "bn1": bn(ks[3], out_channels),
        "bn2": bn(ks[4], out_channels),
        "bn3": bn(ks[5], out_channels),
    }


if __name__ == "__main__":
    B, Cin, Cout, H, W = 2, 4, 8, 16, 16

    key = jax.random.PRNGKey(0)
    kx, kp = jax.random.split(key)
    x = jax.random.normal(kx, (B, Cin, H, W), jnp.float32)       # NCHW like PyTorch
    params = make_params(kp, Cin, Cout)

    fwd = jax.jit(downsample_forward)
    x1, x2 = jax.block_until_ready(fwd(x, params))
    assert x1.shape == (B, Cout, H, W), x1.shape
    assert x2.shape == (B, Cout, H // 2, W // 2), x2.shape

    r1, r2 = jax.block_until_ready(jax.jit(reference_forward)(x, params))
    np.testing.assert_allclose(np.asarray(x1), np.asarray(r1), rtol=2e-2, atol=2e-2)
    np.testing.assert_allclose(np.asarray(x2), np.asarray(r2), rtol=2e-2, atol=2e-2)

    print("KERNEL_OK")
</pallas_src>

<mosaic_0001>
module attributes {stable_mosaic.version = 11 : i64} {
  func.func @kernel(%arg0: i32, %arg1: memref<1x4x4x101xbf16, #tpu.memory_space<vmem>>, %arg2: memref<4x1x81xf32, #tpu.memory_space<vmem>>, %arg3: memref<8x36xbf16, #tpu.memory_space<vmem>>, %arg4: memref<8x1xf32, #tpu.memory_space<vmem>>, %arg5: memref<8x72xbf16, #tpu.memory_space<vmem>>, %arg6: memref<8x1xf32, #tpu.memory_space<vmem>>, %arg7: memref<8x72xbf16, #tpu.memory_space<vmem>>, %arg8: memref<8x1xf32, #tpu.memory_space<vmem>>, %arg9: memref<1x4x8x81xf32, #tpu.memory_space<vmem>>, %arg10: memref<1x8x72xf32, #tpu.memory_space<vmem>>, %arg11: memref<4x8x101xbf16, #tpu.memory_space<vmem>>, %arg12: memref<4x8x101xbf16, #tpu.memory_space<vmem>>) attributes {dimension_semantics = [#tpu.dimension_semantics<parallel>], iteration_bounds = array<i64: 2>, scalar_prefetch = 0 : i64, scratch_operands = 2 : i64, tpu.core_type = #tpu.core_type<tc>, window_params = [{transform_indices = @transform_0, window_bounds = array<i64: 1, 4, 4, 101>}, {pipeline_mode = #tpu.pipeline_mode<synchronous>, transform_indices = @transform_1, window_bounds = array<i64: 4, 1, 81>}, {pipeline_mode = #tpu.pipeline_mode<synchronous>, transform_indices = @transform_2, window_bounds = array<i64: 8, 36>}, {pipeline_mode = #tpu.pipeline_mode<synchronous>, transform_indices = @transform_3, window_bounds = array<i64: 8, 1>}, {pipeline_mode = #tpu.pipeline_mode<synchronous>, transform_indices = @transform_4, window_bounds = array<i64: 8, 72>}, {pipeline_mode = #tpu.pipeline_mode<synchronous>, transform_indices = @transform_5, window_bounds = array<i64: 8, 1>}, {pipeline_mode = #tpu.pipeline_mode<synchronous>, transform_indices = @transform_6, window_bounds = array<i64: 8, 72>}, {pipeline_mode = #tpu.pipeline_mode<synchronous>, transform_indices = @transform_7, window_bounds = array<i64: 8, 1>}, {transform_indices = @transform_8, window_bounds = array<i64: 1, 4, 8, 81>}, {transform_indices = @transform_9, window_bounds = array<i64: 1, 8, 72>}]} {
    %cst = arith.constant 0.000000e+00 : bf16
    %0 = vector.broadcast %cst : bf16 to vector<4x8x10xbf16>
    %c0 = arith.constant 0 : index
    %c0_0 = arith.constant 0 : index
    %c0_1 = arith.constant 0 : index
    %1 = vector.load %arg11[%c0, %c0_0, %c0_1] : memref<4x8x101xbf16, #tpu.memory_space<vmem>>, vector<4x8x10xbf16>
    tpu.vector_store %arg11[%c0, %c0_0, %c0_1], %0 {strides = array<i32>} : memref<4x8x101xbf16, #tpu.memory_space<vmem>>, vector<4x8x10xbf16>,
    %cst_2 = arith.constant 0.000000e+00 : bf16
    %2 = vector.broadcast %cst_2 : bf16 to vector<4x8x10xbf16>
    %c0_3 = arith.constant 0 : index
    %c0_4 = arith.constant 0 : index
    %c91 = arith.constant 91 : index
    %3 = vector.load %arg11[%c0_3, %c0_4, %c91] : memref<4x8x101xbf16, #tpu.memory_space<vmem>>, vector<4x8x10xbf16>
    tpu.vector_store %arg11[%c0_3, %c0_4, %c91], %2 {strides = array<i32>} : memref<4x8x101xbf16, #tpu.memory_space<vmem>>, vector<4x8x10xbf16>,
    %cst_5 = arith.constant 0.000000e+00 : bf16
    %4 = vector.broadcast %cst_5 : bf16 to vector<4x8x10xbf16>
    %c0_6 = arith.constant 0 : index
    %c0_7 = arith.constant 0 : index
    %c0_8 = arith.constant 0 : index
    %5 = vector.load %arg12[%c0_6, %c0_7, %c0_8] : memref<4x8x101xbf16, #tpu.memory_space<vmem>>, vector<4x8x10xbf16>
    tpu.vector_store %arg12[%c0_6, %c0_7, %c0_8], %4 {strides = array<i32>} : memref<4x8x101xbf16, #tpu.memory_space<vmem>>, vector<4x8x10xbf16>,
    %cst_9 = arith.constant 0.000000e+00 : bf16
    %6 = vector.broadcast %cst_9 : bf16 to vector<4x8x10xbf16>
    %c0_10 = arith.constant 0 : index
    %c0_11 = arith.constant 0 : index
    %c91_12 = arith.constant 91 : index
    %7 = vector.load %arg12[%c0_10, %c0_11, %c91_12] : memref<4x8x101xbf16, #tpu.memory_space<vmem>>, vector<4x8x10xbf16>
    tpu.vector_store %arg12[%c0_10, %c0_11, %c91_12], %6 {strides = array<i32>} : memref<4x8x101xbf16, #tpu.memory_space<vmem>>, vector<4x8x10xbf16>,
    %c0_13 = arith.constant 0 : index
    %c0_14 = arith.constant 0 : index
    %8 = vector.load %arg3[%c0_13, %c0_14] : memref<8x36xbf16, #tpu.memory_space<vmem>>, vector<8x36xbf16>
    %c0_15 = arith.constant 0 : index
    %c0_16 = arith.constant 0 : index
    %9 = vector.load %arg4[%c0_15, %c0_16] : memref<8x1xf32, #tpu.memory_space<vmem>>, vector<8x1xf32>
    %c0_17 = arith.constant 0 : index
    %c0_18 = arith.constant 0 : index
    %10 = vector.load %arg5[%c0_17, %c0_18] : memref<8x72xbf16, #tpu.memory_space<vmem>>, vector<8x72xbf16>
    %c0_19 = arith.constant 0 : index
    %c0_20 = arith.constant 0 : index
    %11 = vector.load %arg6[%c0_19, %c0_20] : memref<8x1xf32, #tpu.memory_space<vmem>>, vector<8x1xf32>
    %c0_21 = arith.constant 0 : index
    %c3 = arith.constant 3 : index
    %c0_22 = arith.constant 0 : index
    %c0_23 = arith.constant 0 : index
    %12 = vector.load %arg1[%c0_21, %c3, %c0_22, %c0_23] : memref<1x4x4x101xbf16, #tpu.memory_space<vmem>>, vector<1x1x4x81xbf16>
    %13 = vector.shape_cast %12 : vector<1x1x4x81xbf16> to vector<4x81xbf16>
    %c0_24 = arith.constant 0 : index
    %c2 = arith.constant 2 : index
    %c0_25 = arith.constant 0 : index
    %c1 = arith.constant 1 : index
    %14 = vector.load %arg1[%c0_24, %c2, %c0_25, %c1] : memref<1x4x4x101xbf16, #tpu.memory_space<vmem>>, vector<1x1x4x81xbf16>
    %15 = vector.shape_cast %14 : vector<1x1x4x81xbf16> to vector<4x81xbf16>
    %c0_26 = arith.constant 0 : index
    %c3_27 = arith.constant 3 : index
    %c0_28 = arith.constant 0 : index
    %c1_29 = arith.constant 1 : index
    %16 = vector.load %arg1[%c0_26, %c3_27, %c0_28, %c1_29] : memref<1x4x4x101xbf16, #tpu.memory_space<vmem>>, vector<1x1x4x81xbf16>
    %17 = vector.shape_cast %16 : vector<1x1x4x81xbf16> to vector<4x81xbf16>
    %c0_30 = arith.constant 0 : index
    %c1_31 = arith.constant 1 : index
    %c0_32 = arith.constant 0 : index
    %c9 = arith.constant 9 : index
    %18 = vector.load %arg1[%c0_30, %c1_31, %c0_32, %c9] : memref<1x4x4x101xbf16, #tpu.memory_space<vmem>>, vector<1x1x4x81xbf16>
    %19 = vector.shape_cast %18 : vector<1x1x4x81xbf16> to vector<4x81xbf16>
    %c0_33 = arith.constant 0 : index
    %c0_34 = arith.constant 0 : index
    %c0_35 = arith.constant 0 : index
    %c10 = arith.constant 10 : index
    %20 = vector.load %arg1[%c0_33, %c0_34, %c0_35, %c10] : memref<1x4x4x101xbf16, #tpu.memory_space<vmem>>, vector<1x1x4x81xbf16>
    %21 = vector.shape_cast %20 : vector<1x1x4x81xbf16> to vector<4x81xbf16>
    %c0_36 = arith.constant 0 : index
    %c1_37 = arith.constant 1 : index
    %c0_38 = arith.constant 0 : index
    %c10_39 = arith.constant 10 : index
    %22 = vector.load %arg1[%c0_36, %c1_37, %c0_38, %c10_39] : memref<1x4x4x101xbf16, #tpu.memory_space<vmem>>, vector<1x1x4x81xbf16>
    %23 = vector.shape_cast %22 : vector<1x1x4x81xbf16> to vector<4x81xbf16>
    %c0_40 = arith.constant 0 : index
    %c3_41 = arith.constant 3 : index
    %c0_42 = arith.constant 0 : index
    %c9_43 = arith.constant 9 : index
    %24 = vector.load %arg1[%c0_40, %c3_41, %c0_42, %c9_43] : memref<1x4x4x101xbf16, #tpu.memory_space<vmem>>, vector<1x1x4x81xbf16>
    %25 = vector.shape_cast %24 : vector<1x1x4x81xbf16> to vector<4x81xbf16>
    %c0_44 = arith.constant 0 : index
    %c2_45 = arith.constant 2 : index
    %c0_46 = arith.constant 0 : index
    %c10_47 = arith.constant 10 : index
    %26 = vector.load %arg1[%c0_44, %c2_45, %c0_46, %c10_47] : memref<1x4x4x101xbf16, #tpu.memory_space<vmem>>, vector<1x1x4x81xbf16>
    %27 = vector.shape_cast %26 : vector<1x1x4x81xbf16> to vector<4x81xbf16>
    %c0_48 = arith.constant 0 : index
    %c3_49 = arith.constant 3 : index
    %c0_50 = arith.constant 0 : index
    %c10_51 = arith.constant 10 : index
    %28 = vector.load %arg1[%c0_48, %c3_49, %c0_50, %c10_51] : memref<1x4x4x101xbf16, #tpu.memory_space<vmem>>, vector<1x1x4x81xbf16>
    %29 = vector.shape_cast %28 : vector<1x1x4x81xbf16> to vector<4x81xbf16>
    %30 = tpu.concatenate %13, %15, %17, %19, %21, %23, %25, %27, %29 in 0 : vector<4x81xbf16>, vector<4x81xbf16>, vector<4x81xbf16>, vector<4x81xbf16>, vector<4x81xbf16>, vector<4x81xbf16>, vector<4x81xbf16>, vector<4x81xbf16>, vector<4x81xbf16> -> vector<36x81xbf16>
    %cst_52 = arith.constant dense<0.000000e+00> : vector<8x81xf32>
    %31 = tpu.matmul %8, %30, %cst_52 {dimension_numbers = #tpu.dot_dimension_numbers<[1], [0], [0], [1], [0, 0, 1, 1], [], []>} : vector<8x36xbf16>, vector<36x81xbf16>, vector<8x81xf32> -> vector<8x81xf32>
    %32 = vector.broadcast %9 : vector<8x1xf32> to vector<8x81xf32>
    %33 = arith.addf %31, %32 : vector<8x81xf32>
    %cst_53 = arith.constant 0.000000e+00 : f32
    %34 = vector.broadcast %cst_53 : f32 to vector<8x81xf32>
    %35 = arith.maximumf %33, %34 : vector<8x81xf32>
    %c0_54 = arith.constant 0 : index
    %c0_55 = arith.constant 0 : index
    %c0_56 = arith.constant 0 : index
    %36 = vector.load %arg2[%c0_54, %c0_55, %c0_56] : memref<4x1x81xf32, #tpu.memory_space<vmem>>, vector<1x1x81xf32>
    %37 = vector.shape_cast %36 : vector<1x1x81xf32> to vector<1x81xf32>
    %38 = vector.broadcast %37 : vector<1x81xf32> to vector<8x81xf32>
    %39 = arith.mulf %35, %38 : vector<8x81xf32>
    %40 = arith.truncf %39 : vector<8x81xf32> to vector<8x81xbf16>
    %c0_57 = arith.constant 0 : index
    %c0_58 = arith.constant 0 : index
    %c10_59 = arith.constant 10 : index
    %41 = vector.load %arg11[%c0_57, %c0_58, %c10_59] : memref<4x8x101xbf16, #tpu.memory_space<vmem>>, vector<1x8x81xbf16>
    %42 = vector.shape_cast %41 : vector<1x8x81xbf16> to vector<8x81xbf16>
    %43 = vector.shape_cast %40 : vector<8x81xbf16> to vector<1x8x81xbf16>
    tpu.vector_store %arg11[%c0_57, %c0_58, %c10_59], %43 {strides = array<i32>} : memref<4x8x101xbf16, #tpu.memory_space<vmem>>, vector<1x8x81xbf16>,
    %c0_60 = arith.constant 0 : index
    %c2_61 = arith.constant 2 : index
    %c0_62 = arith.constant 0 : index
    %c1_63 = arith.constant 1 : index
    %44 = vector.load %arg1[%c0_60, %c2_61, %c0_62, %c1_63] : memref<1x4x4x101xbf16, #tpu.memory_space<vmem>>, vector<1x1x4x81xbf16>
    %45 = vector.shape_cast %44 : vector<1x1x4x81xbf16> to vector<4x81xbf16>
    %c0_64 = arith.constant 0 : index
    %c3_65 = arith.constant 3 : index
    %c0_66 = arith.constant 0 : index
    %c1_67 = arith.constant 1 : index
    %46 = vector.load %arg1[%c0_64, %c3_65, %c0_66, %c1_67] : memref<1x4x4x101xbf16, #tpu.memory_space<vmem>>, vector<1x1x4x81xbf16>
    %47 = vector.shape_cast %46 : vector<1x1x4x81xbf16> to vector<4x81xbf16>
    %c0_68 = arith.constant 0 : index
    %c2_69 = arith.constant 2 : index
    %c0_70 = arith.constant 0 : index
    %c2_71 = arith.constant 2 : index
    %48 = vector.load %arg1[%c0_68, %c2_69, %c0_70, %c2_71] : memref<1x4x4x101xbf16, #tpu.memory_space<vmem>>, vector<1x1x4x81xbf16>
    %49 = vector.shape_cast %48 : vector<1x1x4x81xbf16> to vector<4x81xbf16>
    %c0_72 = arith.constant 0 : index
    %c0_73 = arith.constant 0 : index
    %c0_74 = arith.constant 0 : index
    %c10_75 = arith.constant 10 : index
    %50 = vector.load %arg1[%c0_72, %c0_73, %c0_74, %c10_75] : memref<1x4x4x101xbf16, #tpu.memory_space<vmem>>, vector<1x1x4x81xbf16>
    %51 = vector.shape_cast %50 : vector<1x1x4x81xbf16> to vector<4x81xbf16>
    %c0_76 = arith.constant 0 : index
    %c1_77 = arith.constant 1 : index
    %c0_78 = arith.constant 0 : index
    %c10_79 = arith.constant 10 : index
    %52 = vector.load %arg1[%c0_76, %c1_77, %c0_78, %c10_79] : memref<1x4x4x101xbf16, #tpu.memory_space<vmem>>, vector<1x1x4x81xbf16>
    %53 = vector.shape_cast %52 : vector<1x1x4x81xbf16> to vector<4x81xbf16>
    %c0_80 = arith.constant 0 : index
    %c0_81 = arith.constant 0 : index
    %c0_82 = arith.constant 0 : index
    %c11 = arith.constant 11 : index
    %54 = vector.load %arg1[%c0_80, %c0_81, %c0_82, %c11] : memref<1x4x4x101xbf16, #tpu.memory_space<vmem>>, vector<1x1x4x81xbf16>
    %55 = vector.shape_cast %54 : vector<1x1x4x81xbf16> to vector<4x81xbf16>
    %c0_83 = arith.constant 0 : index
    %c2_84 = arith.constant 2 : index
    %c0_85 = arith.constant 0 : index
    %c10_86 = arith.constant 10 : index
    %56 = vector.load %arg1[%c0_83, %c2_84, %c0_85, %c10_86] : memref<1x4x4x101xbf16, #tpu.memory_space<vmem>>, vector<1x1x4x81xbf16>
    %57 = vector.shape_cast %56 : vector<1x1x4x81xbf16> to vector<4x81xbf16>
    %c0_87 = arith.constant 0 : index
    %c3_88 = arith.constant 3 : index
    %c0_89 = arith.constant 0 : index
    %c10_90 = arith.constant 10 : index
    %58 = vector.load %arg1[%c0_87, %c3_88, %c0_89, %c10_90] : memref<1x4x4x101xbf16, #tpu.memory_space<vmem>>, vector<1x1x4x81xbf16>
    %59 = vector.shape_cast %58 : vector<1x1x4x81xbf16> to vector<4x81xbf16>
    %c0_91 = arith.constant 0 : index
    %c2_92 = arith.constant 2 : index
    %c0_93 = arith.constant 0 : index
    %c11_94 = arith.constant 11 : index
    %60 = vector.load %arg1[%c0_91, %c2_92, %c0_93, %c11_94] : memref<1x4x4x101xbf16, #tpu.memory_space<vmem>>, vector<1x1x4x81xbf16>
    %61 = vector.shape_cast %60 : vector<1x1x4x81xbf16> to vector<4x81xbf16>
    %62 = tpu.concatenate %45, %47, %49, %51, %53, %55, %57, %59, %61 in 0 : vector<4x81xbf16>, vector<4x81xbf16>, vector<4x81xbf16>, vector<4x81xbf16>, vector<4x81xbf16>, vector<4x81xbf16>, vector<4x81xbf16>, vector<4x81xbf16>, vector<4x81xbf16> -> vector<36x81xbf16>
    %cst_95 = arith.constant dense<0.000000e+00> : vector<8x81xf32>
    %63 = tpu.matmul %8, %62, %cst_95 {dimension_numbers = #tpu.dot_dimension_numbers<[1], [0], [0], [1], [0, 0, 1, 1], [], []>} : vector<8x36xbf16>, vector<36x81xbf16>, vector<8x81xf32> -> vector<8x81xf32>
    %64 = vector.broadcast %9 : vector<8x1xf32> to vector<8x81xf32>
    %65 = arith.addf %63, %64 : vector<8x81xf32>
    %cst_96 = arith.constant 0.000000e+00 : f32
    %66 = vector.broadcast %cst_96 : f32 to vector<8x81xf32>
    %67 = arith.maximumf %65, %66 : vector<8x81xf32>
    %c1_97 = arith.constant 1 : index
    %c0_98 = arith.constant 0 : index
    %c0_99 = arith.constant 0 : index
    %68 = vector.load %arg2[%c1_97, %c0_98, %c0_99] : memref<4x1x81xf32, #tpu.memory_space<vmem>>, vector<1x1x81xf32>
    %69 = vector.shape_cast %68 : vector<1x1x81xf32> to vector<1x81xf32>
    %70 = vector.broadcast %69 : vector<1x81xf32> to vector<8x81xf32>
    %71 = arith.mulf %67, %70 : vector<8x81xf32>
    %72 = arith.truncf %71 : vector<8x81xf32> to vector<8x81xbf16>
    %c1_100 = arith.constant 1 : index
    %c0_101 = arith.constant 0 : index
    %c10_102 = arith.constant 10 : index
    %73 = vector.load %arg11[%c1_100, %c0_101, %c10_102] : memref<4x8x101xbf16, #tpu.memory_space<vmem>>, vector<1x8x81xbf16>
    %74 = vector.shape_cast %73 : vector<1x8x81xbf16> to vector<8x81xbf16>
    %75 = vector.shape_cast %72 : vector<8x81xbf16> to vector<1x8x81xbf16>
    tpu.vector_store %arg11[%c1_100, %c0_101, %c10_102], %75 {strides = array<i32>} : memref<4x8x101xbf16, #tpu.memory_space<vmem>>, vector<1x8x81xbf16>,
    %c0_103 = arith.constant 0 : index
    %c1_104 = arith.constant 1 : index
    %c0_105 = arith.constant 0 : index
    %c9_106 = arith.constant 9 : index
    %76 = vector.load %arg1[%c0_103, %c1_104, %c0_105, %c9_106] : memref<1x4x4x101xbf16, #tpu.memory_space<vmem>>, vector<1x1x4x81xbf16>
    %77 = vector.shape_cast %76 : vector<1x1x4x81xbf16> to vector<4x81xbf16>
    %c0_107 = arith.constant 0 : index
    %c0_108 = arith.constant 0 : index
    %c0_109 = arith.constant 0 : index
    %c10_110 = arith.constant 10 : index
    %78 = vector.load %arg1[%c0_107, %c0_108, %c0_109, %c10_110] : memref<1x4x4x101xbf16, #tpu.memory_space<vmem>>, vector<1x1x4x81xbf16>
    %79 = vector.shape_cast %78 : vector<1x1x4x81xbf16> to vector<4x81xbf16>
    %c0_111 = arith.constant 0 : index
    %c1_112 = arith.constant 1 : index
    %c0_113 = arith.constant 0 : index
    %c10_114 = arith.constant 10 : index
    %80 = vector.load %arg1[%c0_111, %c1_112, %c0_113, %c10_114] : memref<1x4x4x101xbf16, #tpu.memory_space<vmem>>, vector<1x1x4x81xbf16>
    %81 = vector.shape_cast %80 : vector<1x1x4x81xbf16> to vector<4x81xbf16>
    %c0_115 = arith.constant 0 : index
    %c3_116 = arith.constant 3 : index
    %c0_117 = arith.constant 0 : index
    %c9_118 = arith.constant 9 : index
    %82 = vector.load %arg1[%c0_115, %c3_116, %c0_117, %c9_118] : memref<1x4x4x101xbf16, #tpu.memory_space<vmem>>, vector<1x1x4x81xbf16>
    %83 = vector.shape_cast %82 : vector<1x1x4x81xbf16> to vector<4x81xbf16>
    %c0_119 = arith.constant 0 : index
    %c2_120 = arith.constant 2 : index
    %c0_121 = arith.constant 0 : index
    %c10_122 = arith.constant 10 : index
    %84 = vector.load %arg1[%c0_119, %c2_120, %c0_121, %c10_122] : memref<1x4x4x101xbf16, #tpu.memory_space<vmem>>, vector<1x1x4x81xbf16>
    %85 = vector.shape_cast %84 : vector<1x1x4x81xbf16> to vector<4x81xbf16>
    %c0_123 = arith.constant 0 : index
    %c3_124 = arith.constant 3 : index
    %c0_125 = arith.constant 0 : index
    %c10_126 = arith.constant 10 : index
    %86 = vector.load %arg1[%c0_123, %c3_124, %c0_125, %c10_126] : memref<1x4x4x101xbf16, #tpu.memory_space<vmem>>, vector<1x1x4x81xbf16>
    %87 = vector.shape_cast %86 : vector<1x1x4x81xbf16> to vector<4x81xbf16>
    %c0_127 = arith.constant 0 : index
    %c1_128 = arith.constant 1 : index
    %c0_129 = arith.constant 0 : index
    %c18 = arith.constant 18 : index
    %88 = vector.load %arg1[%c0_127, %c1_128, %c0_129, %c18] : memref<1x4x4x101xbf16, #tpu.memory_space<vmem>>, vector<1x1x4x81xbf16>
    %89 = vector.shape_cast %88 : vector<1x1x4x81xbf16> to vector<4x81xbf16>
    %c0_130 = arith.constant 0 : index
    %c0_131 = arith.constant 0 : index
    %c0_132 = arith.constant 0 : index
    %c19 = arith.constant 19 : index
    %90 = vector.load %arg1[%c0_130, %c0_131, %c0_132, %c19] : memref<1x4x4x101xbf16, #tpu.memory_space<vmem>>, vector<1x1x4x81xbf16>
    %91 = vector.shape_cast %90 : vector<1x1x4x81xbf16> to vector<4x81xbf16>
    %c0_133 = arith.constant 0 : index
    %c1_134 = arith.constant 1 : index
    %c0_135 = arith.constant 0 : index
    %c19_136 = arith.constant 19 : index
    %92 = vector.load %arg1[%c0_133, %c1_134, %c0_135, %c19_136] : memref<1x4x4x101xbf16, #tpu.memory_space<vmem>>, vector<1x1x4x81xbf16>
    %93 = vector.shape_cast %92 : vector<1x1x4x81xbf16> to vector<4x81xbf16>
    %94 = tpu.concatenate %77, %79, %81, %83, %85, %87, %89, %91, %93 in 0 : vector<4x81xbf16>, vector<4x81xbf16>, vector<4x81xbf16>, vector<4x81xbf16>, vector<4x81xbf16>, vector<4x81xbf16>, vector<4x81xbf16>, vector<4x81xbf16>, vector<4x81xbf16> -> vector<36x81xbf16>
    %cst_137 = arith.constant dense<0.000000e+00> : vector<8x81xf32>
    %95 = tpu.matmul %8, %94, %cst_137 {dimension_numbers = #tpu.dot_dimension_numbers<[1], [0], [0], [1], [0, 0, 1, 1], [], []>} : vector<8x36xbf16>, vector<36x81xbf16>, vector<8x81xf32> -> vector<8x81xf32>
    %96 = vector.broadcast %9 : vector<8x1xf32> to vector<8x81xf32>
    %97 = arith.addf %95, %96 : vector<8x81xf32>
    %cst_138 = arith.constant 0.000000e+00 : f32
    %98 = vector.broadcast %cst_138 : f32 to vector<8x81xf32>
    %99 = arith.maximumf %97, %98 : vector<8x81xf32>
    %c2_139 = arith.constant 2 : index
    %c0_140 = arith.constant 0 : index
    %c0_141 = arith.constant 0 : index
    %100 = vector.load %arg2[%c2_139, %c0_140, %c0_141] : memref<4x1x81xf32, #tpu.memory_space<vmem>>, vector<1x1x81xf32>
    %101 = vector.shape_cast %100 : vector<1x1x81xf32> to vector<1x81xf32>
    %102 = vector.broadcast %101 : vector<1x81xf32> to vector<8x81xf32>
    %103 = arith.mulf %99, %102 : vector<8x81xf32>
    %104 = arith.truncf %103 : vector<8x81xf32> to vector<8x81xbf16>
    %c2_142 = arith.constant 2 : index
    %c0_143 = arith.constant 0 : index
    %c10_144 = arith.constant 10 : index
    %105 = vector.load %arg11[%c2_142, %c0_143, %c10_144] : memref<4x8x101xbf16, #tpu.memory_space<vmem>>, vector<1x8x81xbf16>
    %106 = vector.shape_cast %105 : vector<1x8x81xbf16> to vector<8x81xbf16>
    %107 = vector.shape_cast %104 : vector<8x81xbf16> to vector<1x8x81xbf16>
    tpu.vector_store %arg11[%c2_142, %c0_143, %c10_144], %107 {strides = array<i32>} : memref<4x8x101xbf16, #tpu.memory_space<vmem>>, vector<1x8x81xbf16>,
    %c0_145 = arith.constant 0 : index
    %c0_146 = arith.constant 0 : index
    %c0_147 = arith.constant 0 : index
    %c10_148 = arith.constant 10 : index
    %108 = vector.load %arg1[%c0_145, %c0_146, %c0_147, %c10_148] : memref<1x4x4x101xbf16, #tpu.memory_space<vmem>>, vector<1x1x4x81xbf16>
    %109 = vector.shape_cast %108 : vector<1x1x4x81xbf16> to vector<4x81xbf16>
    %c0_149 = arith.constant 0 : index
    %c1_150 = arith.constant 1 : index
    %c0_151 = arith.constant 0 : index
    %c10_152 = arith.constant 10 : index
    %110 = vector.load %arg1[%c0_149, %c1_150, %c0_151, %c10_152] : memref<1x4x4x101xbf16, #tpu.memory_space<vmem>>, vector<1x1x4x81xbf16>
    %111 = vector.shape_cast %110 : vector<1x1x4x81xbf16> to vector<4x81xbf16>
    %c0_153 = arith.constant 0 : index
    %c0_154 = arith.constant 0 : index
    %c0_155 = arith.constant 0 : index
    %c11_156 = arith.constant 11 : index
    %112 = vector.load %arg1[%c0_153, %c0_154, %c0_155, %c11_156] : memref<1x4x4x101xbf16, #tpu.memory_space<vmem>>, vector<1x1x4x81xbf16>
    %113 = vector.shape_cast %112 : vector<1x1x4x81xbf16> to vector<4x81xbf16>
    %c0_157 = arith.constant 0 : index
    %c2_158 = arith.constant 2 : index
    %c0_159 = arith.constant 0 : index
    %c10_160 = arith.constant 10 : index
    %114 = vector.load %arg1[%c0_157, %c2_158, %c0_159, %c10_160] : memref<1x4x4x101xbf16, #tpu.memory_space<vmem>>, vector<1x1x4x81xbf16>
    %115 = vector.shape_cast %114 : vector<1x1x4x81xbf16> to vector<4x81xbf16>
    %c0_161 = arith.constant 0 : index
    %c3_162 = arith.constant 3 : index
    %c0_163 = arith.constant 0 : index
    %c10_164 = arith.constant 10 : index
    %116 = vector.load %arg1[%c0_161, %c3_162, %c0_163, %c10_164] : memref<1x4x4x101xbf16, #tpu.memory_space<vmem>>, vector<1x1x4x81xbf16>
    %117 = vector.shape_cast %116 : vector<1x1x4x81xbf16> to vector<4x81xbf16>
    %c0_165 = arith.constant 0 : index
    %c2_166 = arith.constant 2 : index
    %c0_167 = arith.constant 0 : index
    %c11_168 = arith.constant 11 : index
    %118 = vector.load %arg1[%c0_165, %c2_166, %c0_167, %c11_168] : memref<1x4x4x101xbf16, #tpu.memory_space<vmem>>, vector<1x1x4x81xbf16>
    %119 = vector.shape_cast %118 : vector<1x1x4x81xbf16> to vector<4x81xbf16>
    %c0_169 = arith.constant 0 : index
    %c0_170 = arith.constant 0 : index
    %c0_171 = arith.constant 0 : index
    %c19_172 = arith.constant 19 : index
    %120 = vector.load %arg1[%c0_169, %c0_170, %c0_171, %c19_172] : memref<1x4x4x101xbf16, #tpu.memory_space<vmem>>, vector<1x1x4x81xbf16>
    %121 = vector.shape_cast %120 : vector<1x1x4x81xbf16> to vector<4x81xbf16>
    %c0_173 = arith.constant 0 : index
    %c1_174 = arith.constant 1 : index
    %c0_175 = arith.constant 0 : index
    %c19_176 = arith.constant 19 : index
    %122 = vector.load %arg1[%c0_173, %c1_174, %c0_175, %c19_176] : memref<1x4x4x101xbf16, #tpu.memory_space<vmem>>, vector<1x1x4x81xbf16>
    %123 = vector.shape_cast %122 : vector<1x1x4x81xbf16> to vector<4x81xbf16>
    %c0_177 = arith.constant 0 : index
    %c0_178 = arith.constant 0 : index
    %c0_179 = arith.constant 0 : index
    %c20 = arith.constant 20 : index
    %124 = vector.load %arg1[%c0_177, %c0_178, %c0_179, %c20] : memref<1x4x4x101xbf16, #tpu.memory_space<vmem>>, vector<1x1x4x81xbf16>
    %125 = vector.shape_cast %124 : vector<1x1x4x81xbf16> to vector<4x81xbf16>
    %126 = tpu.concatenate %109, %111, %113, %115, %117, %119, %121, %123, %125 in 0 : vector<4x81xbf16>, vector<4x81xbf16>, vector<4x81xbf16>, vector<4x81xbf16>, vector<4x81xbf16>, vector<4x81xbf16>, vector<4x81xbf16>, vector<4x81xbf16>, vector<4x81xbf16> -> vector<36x81xbf16>
    %cst_180 = arith.constant dense<0.000000e+00> : vector<8x81xf32>
    %127 = tpu.matmul %8, %126, %cst_180 {dimension_numbers = #tpu.dot_dimension_numbers<[1], [0], [0], [1], [0, 0, 1, 1], [], []>} : vector<8x36xbf16>, vector<36x81xbf16>, vector<8x81xf32> -> vector<8x81xf32>
    %128 = vector.broadcast %9 : vector<8x1xf32> to vector<8x81xf32>
    %129 = arith.addf %127, %128 : vector<8x81xf32>
    %cst_181 = arith.constant 0.000000e+00 : f32
    %130 = vector.broadcast %cst_181 : f32 to vector<8x81xf32>
    %131 = arith.maximumf %129, %130 : vector<8x81xf32>
    %c3_182 = arith.constant 3 : index
    %c0_183 = arith.constant 0 : index
    %c0_184 = arith.constant 0 : index
    %132 = vector.load %arg2[%c3_182, %c0_183, %c0_184] : memref<4x1x81xf32, #tpu.memory_space<vmem>>, vector<1x1x81xf32>
    %133 = vector.shape_cast %132 : vector<1x1x81xf32> to vector<1x81xf32>
    %134 = vector.broadcast %133 : vector<1x81xf32> to vector<8x81xf32>
    %135 = arith.mulf %131, %134 : vector<8x81xf32>
    %136 = arith.truncf %135 : vector<8x81xf32> to vector<8x81xbf16>
    %c3_185 = arith.constant 3 : index
    %c0_186 = arith.constant 0 : index
    %c10_187 = arith.constant 10 : index
    %137 = vector.load %arg11[%c3_185, %c0_186, %c10_187] : memref<4x8x101xbf16, #tpu.memory_space<vmem>>, vector<1x8x81xbf16>
    %138 = vector.shape_cast %137 : vector<1x8x81xbf16> to vector<8x81xbf16>
    %139 = vector.shape_cast %136 : vector<8x81xbf16> to vector<1x8x81xbf16>
    tpu.vector_store %arg11[%c3_185, %c0_186, %c10_187], %139 {strides = array<i32>} : memref<4x8x101xbf16, #tpu.memory_space<vmem>>, vector<1x8x81xbf16>,
    %c3_188 = arith.constant 3 : index
    %c0_189 = arith.constant 0 : index
    %c0_190 = arith.constant 0 : index
    %140 = vector.load %arg11[%c3_188, %c0_189, %c0_190] : memref<4x8x101xbf16, #tpu.memory_space<vmem>>, vector<1x8x81xbf16>
    %141 = vector.shape_cast %140 : vector<1x8x81xbf16> to vector<8x81xbf16>
    %c2_191 = arith.constant 2 : index
    %c0_192 = arith.constant 0 : index
    %c1_193 = arith.constant 1 : index
    %142 = vector.load %arg11[%c2_191, %c0_192, %c1_193] : memref<4x8x101xbf16, #tpu.memory_space<vmem>>, vector<1x8x81xbf16>
    %143 = vector.shape_cast %142 : vector<1x8x81xbf16> to vector<8x81xbf16>
    %c3_194 = arith.constant 3 : index
    %c0_195 = arith.constant 0 : index
    %c1_196 = arith.constant 1 : index
    %144 = vector.load %arg11[%c3_194, %c0_195, %c1_196] : memref<4x8x101xbf16, #tpu.memory_space<vmem>>, vector<1x8x81xbf16>
    %145 = vector.shape_cast %144 : vector<1x8x81xbf16> to vector<8x81xbf16>
    %c1_197 = arith.constant 1 : index
    %c0_198 = arith.constant 0 : index
    %c9_199 = arith.constant 9 : index
    %146 = vector.load %arg11[%c1_197, %c0_198, %c9_199] : memref<4x8x101xbf16, #tpu.memory_space<vmem>>, vector<1x8x81xbf16>
    %147 = vector.shape_cast %146 : vector<1x8x81xbf16> to vector<8x81xbf16>
    %c0_200 = arith.constant 0 : index
    %c0_201 = arith.constant 0 : index
    %c10_202 = arith.constant 10 : index
    %148 = vector.load %arg11[%c0_200, %c0_201, %c10_202] : memref<4x8x101xbf16, #tpu.memory_space<vmem>>, vector<1x8x81xbf16>
    %149 = vector.shape_cast %148 : vector<1x8x81xbf16> to vector<8x81xbf16>
    %c1_203 = arith.constant 1 : index
    %c0_204 = arith.constant 0 : index
    %c10_205 = arith.constant 10 : index
    %150 = vector.load %arg11[%c1_203, %c0_204, %c10_205] : memref<4x8x101xbf16, #tpu.memory_space<vmem>>, vector<1x8x81xbf16>
    %151 = vector.shape_cast %150 : vector<1x8x81xbf16> to vector<8x81xbf16>
    %c3_206 = arith.constant 3 : index
    %c0_207 = arith.constant 0 : index
    %c9_208 = arith.constant 9 : index
    %152 = vector.load %arg11[%c3_206, %c0_207, %c9_208] : memref<4x8x101xbf16, #tpu.memory_space<vmem>>, vector<1x8x81xbf16>
    %153 = vector.shape_cast %152 : vector<1x8x81xbf16> to vector<8x81xbf16>
    %c2_209 = arith.constant 2 : index
    %c0_210 = arith.constant 0 : index
    %c10_211 = arith.constant 10 : index
    %154 = vector.load %arg11[%c2_209, %c0_210, %c10_211] : memref<4x8x101xbf16, #tpu.memory_space<vmem>>, vector<1x8x81xbf16>
    %155 = vector.shape_cast %154 : vector<1x8x81xbf16> to vector<8x81xbf16>
    %c3_212 = arith.constant 3 : index
    %c0_213 = arith.constant 0 : index
    %c10_214 = arith.constant 10 : index
    %156 = vector.load %arg11[%c3_212, %c0_213, %c10_214] : memref<4x8x101xbf16, #tpu.memory_space<vmem>>, vector<1x8x81xbf16>
    %157 = vector.shape_cast %156 : vector<1x8x81xbf16> to vector<8x81xbf16>
    %158 = tpu.concatenate %141, %143, %145, %147, %149, %151, %153, %155, %157 in 0 : vector<8x81xbf16>, vector<8x81xbf16>, vector<8x81xbf16>, vector<8x81xbf16>, vector<8x81xbf16>, vector<8x81xbf16>, vector<8x81xbf16>, vector<8x81xbf16>, vector<8x81xbf16> -> vector<72x81xbf16>
    %cst_215 = arith.constant dense<0.000000e+00> : vector<8x81xf32>
    %159 = tpu.matmul %10, %158, %cst_215 {dimension_numbers = #tpu.dot_dimension_numbers<[1], [0], [0], [1], [0, 0, 1, 1], [], []>} : vector<8x72xbf16>, vector<72x81xbf16>, vector<8x81xf32> -> vector<8x81xf32>
    %160 = vector.broadcast %11 : vector<8x1xf32> to vector<8x81xf32>
    %161 = arith.addf %159, %160 : vector<8x81xf32>
    %cst_216 = arith.constant 0.000000e+00 : f32
    %162 = vector.broadcast %cst_216 : f32 to vector<8x81xf32>
    %163 = arith.maximumf %161, %162 : vector<8x81xf32>
    %c0_217 = arith.constant 0 : index
    %c0_218 = arith.constant 0 : index
    %c0_219 = arith.constant 0 : index
    %164 = vector.load %arg2[%c0_217, %c0_218, %c0_219] : memref<4x1x81xf32, #tpu.memory_space<vmem>>, vector<1x1x81xf32>
    %165 = vector.shape_cast %164 : vector<1x1x81xf32> to vector<1x81xf32>
    %166 = vector.broadcast %165 : vector<1x81xf32> to vector<8x81xf32>
    %167 = arith.mulf %163, %166 : vector<8x81xf32>
    %c0_220 = arith.constant 0 : index
    %c0_221 = arith.constant 0 : index
    %c0_222 = arith.constant 0 : index
    %c0_223 = arith.constant 0 : index
    %168 = vector.load %arg9[%c0_220, %c0_221, %c0_222, %c0_223] : memref<1x4x8x81xf32, #tpu.memory_space<vmem>>, vector<1x1x8x81xf32>
    %169 = vector.shape_cast %168 : vector<1x1x8x81xf32> to vector<8x81xf32>
    %170 = vector.shape_cast %167 : vector<8x81xf32> to vector<1x1x8x81xf32>
    tpu.vector_store %arg9[%c0_220, %c0_221, %c0_222, %c0_223], %170 {strides = array<i32>} : memref<1x4x8x81xf32, #tpu.memory_space<vmem>>, vector<1x1x8x81xf32>,
    %171 = arith.truncf %167 : vector<8x81xf32> to vector<8x81xbf16>
    %c0_224 = arith.constant 0 : index
    %c0_225 = arith.constant 0 : index
    %c10_226 = arith.constant 10 : index
    %172 = vector.load %arg12[%c0_224, %c0_225, %c10_226] : memref<4x8x101xbf16, #tpu.memory_space<vmem>>, vector<1x8x81xbf16>
    %173 = vector.shape_cast %172 : vector<1x8x81xbf16> to vector<8x81xbf16>
    %174 = vector.shape_cast %171 : vector<8x81xbf16> to vector<1x8x81xbf16>
    tpu.vector_store %arg12[%c0_224, %c0_225, %c10_226], %174 {strides = array<i32>} : memref<4x8x101xbf16, #tpu.memory_space<vmem>>, vector<1x8x81xbf16>,
    %c2_227 = arith.constant 2 : index
    %c0_228 = arith.constant 0 : index
    %c1_229 = arith.constant 1 : index
    %175 = vector.load %arg11[%c2_227, %c0_228, %c1_229] : memref<4x8x101xbf16, #tpu.memory_space<vmem>>, vector<1x8x81xbf16>
    %176 = vector.shape_cast %175 : vector<1x8x81xbf16> to vector<8x81xbf16>
    %c3_230 = arith.constant 3 : index
    %c0_231 = arith.constant 0 : index
    %c1_232 = arith.constant 1 : index
    %177 = vector.load %arg11[%c3_230, %c0_231, %c1_232] : memref<4x8x101xbf16, #tpu.memory_space<vmem>>, vector<1x8x81xbf16>
    %178 = vector.shape_cast %177 : vector<1x8x81xbf16> to vector<8x81xbf16>
    %c2_233 = arith.constant 2 : index
    %c0_234 = arith.constant 0 : index
    %c2_235 = arith.constant 2 : index
    %179 = vector.load %arg11[%c2_233, %c0_234, %c2_235] : memref<4x8x101xbf16, #tpu.memory_space<vmem>>, vector<1x8x81xbf16>
    %180 = vector.shape_cast %179 : vector<1x8x81xbf16> to vector<8x81xbf16>
    %c0_236 = arith.constant 0 : index
    %c0_237 = arith.constant 0 : index
    %c10_238 = arith.constant 10 : index
    %181 = vector.load %arg11[%c0_236, %c0_237, %c10_238] : memref<4x8x101xbf16, #tpu.memory_space<vmem>>, vector<1x8x81xbf16>
    %182 = vector.shape_cast %181 : vector<1x8x81xbf16> to vector<8x81xbf16>
    %c1_239 = arith.constant 1 : index
    %c0_240 = arith.constant 0 : index
    %c10_241 = arith.constant 10 : index
    %183 = vector.load %arg11[%c1_239, %c0_240, %c10_241] : memref<4x8x101xbf16, #tpu.memory_space<vmem>>, vector<1x8x81xbf16>
    %184 = vector.shape_cast %183 : vector<1x8x81xbf16> to vector<8x81xbf16>
    %c0_242 = arith.constant 0 : index
    %c0_243 = arith.constant 0 : index
    %c11_244 = arith.constant 11 : index
    %185 = vector.load %arg11[%c0_242, %c0_243, %c11_244] : memref<4x8x101xbf16, #tpu.memory_space<vmem>>, vector<1x8x81xbf16>
    %186 = vector.shape_cast %185 : vector<1x8x81xbf16> to vector<8x81xbf16>
    %c2_245 = arith.constant 2 : index
    %c0_246 = arith.constant 0 : index
    %c10_247 = arith.constant 10 : index
    %187 = vector.load %arg11[%c2_245, %c0_246, %c10_247] : memref<4x8x101xbf16, #tpu.memory_space<vmem>>, vector<1x8x81xbf16>
    %188 = vector.shape_cast %187 : vector<1x8x81xbf16> to vector<8x81xbf16>
    %c3_248 = arith.constant 3 : index
    %c0_249 = arith.constant 0 : index
    %c10_250 = arith.constant 10 : index
    %189 = vector.load %arg11[%c3_248, %c0_249, %c10_250] : memref<4x8x101xbf16, #tpu.memory_space<vmem>>, vector<1x8x81xbf16>
    %190 = vector.shape_cast %189 : vector<1x8x81xbf16> to vector<8x81xbf16>
    %c2_251 = arith.constant 2 : index
    %c0_252 = arith.constant 0 : index
    %c11_253 = arith.constant 11 : index
    %191 = vector.load %arg11[%c2_251, %c0_252, %c11_253] : memref<4x8x101xbf16, #tpu.memory_space<vmem>>, vector<1x8x81xbf16>
    %192 = vector.shape_cast %191 : vector<1x8x81xbf16> to vector<8x81xbf16>
    %193 = tpu.concatenate %176, %178, %180, %182, %184, %186, %188, %190, %192 in 0 : vector<8x81xbf16>, vector<8x81xbf16>, vector<8x81xbf16>, vector<8x81xbf16>, vector<8x81xbf16>, vector<8x81xbf16>, vector<8x81xbf16>, vector<8x81xbf16>, vector<8x81xbf16> -> vector<72x81xbf16>
    %cst_254 = arith.constant dense<0.000000e+00> : vector<8x81xf32>
    %194 = tpu.matmul %10, %193, %cst_254 {dimension_numbers = #tpu.dot_dimension_numbers<[1], [0], [0], [1], [0, 0, 1, 1], [], []>} : vector<8x72xbf16>, vector<72x81xbf16>, vector<8x81xf32> -> vector<8x81xf32>
    %195 = vector.broadcast %11 : vector<8x1xf32> to vector<8x81xf32>
    %196 = arith.addf %194, %195 : vector<8x81xf32>
    %cst_255 = arith.constant 0.000000e+00 : f32
    %197 = vector.broadcast %cst_255 : f32 to vector<8x81xf32>
    %198 = arith.maximumf %196, %197 : vector<8x81xf32>
    %c1_256 = arith.constant 1 : index
    %c0_257 = arith.constant 0 : index
    %c0_258 = arith.constant 0 : index
    %199 = vector.load %arg2[%c1_256, %c0_257, %c0_258] : memref<4x1x81xf32, #tpu.memory_space<vmem>>, vector<1x1x81xf32>
    %200 = vector.shape_cast %199 : vector<1x1x81xf32> to vector<1x81xf32>
    %201 = vector.broadcast %200 : vector<1x81xf32> to vector<8x81xf32>
    %202 = arith.mulf %198, %201 : vector<8x81xf32>
    %c0_259 = arith.constant 0 : index
    %c1_260 = arith.constant 1 : index
    %c0_261 = arith.constant 0 : index
    %c0_262 = arith.constant 0 : index
    %203 = vector.load %arg9[%c0_259, %c1_260, %c0_261, %c0_262] : memref<1x4x8x81xf32, #tpu.memory_space<vmem>>, vector<1x1x8x81xf32>
    %204 = vector.shape_cast %203 : vector<1x1x8x81xf32> to vector<8x81xf32>
    %205 = vector.shape_cast %202 : vector<8x81xf32> to vector<1x1x8x81xf32>
    tpu.vector_store %arg9[%c0_259, %c1_260, %c0_261, %c0_262], %205 {strides = array<i32>} : memref<1x4x8x81xf32, #tpu.memory_space<vmem>>, vector<1x1x8x81xf32>,
    %206 = arith.truncf %202 : vector<8x81xf32> to vector<8x81xbf16>
    %c1_263 = arith.constant 1 : index
    %c0_264 = arith.constant 0 : index
    %c10_265 = arith.constant 10 : index
    %207 = vector.load %arg12[%c1_263, %c0_264, %c10_265] : memref<4x8x101xbf16, #tpu.memory_space<vmem>>, vector<1x8x81xbf16>
    %208 = vector.shape_cast %207 : vector<1x8x81xbf16> to vector<8x81xbf16>
    %209 = vector.shape_cast %206 : vector<8x81xbf16> to vector<1x8x81xbf16>
    tpu.vector_store %arg12[%c1_263, %c0_264, %c10_265], %209 {strides = array<i32>} : memref<4x8x101xbf16, #tpu.memory_space<vmem>>, vector<1x8x81xbf16>,
    %c1_266 = arith.constant 1 : index
    %c0_267 = arith.constant 0 : index
    %c9_268 = arith.constant 9 : index
    %210 = vector.load %arg11[%c1_266, %c0_267, %c9_268] : memref<4x8x101xbf16, #tpu.memory_space<vmem>>, vector<1x8x81xbf16>
    %211 = vector.shape_cast %210 : vector<1x8x81xbf16> to vector<8x81xbf16>
    %c0_269 = arith.constant 0 : index
    %c0_270 = arith.constant 0 : index
    %c10_271 = arith.constant 10 : index
    %212 = vector.load %arg11[%c0_269, %c0_270, %c10_271] : memref<4x8x101xbf16, #tpu.memory_space<vmem>>, vector<1x8x81xbf16>
    %213 = vector.shape_cast %212 : vector<1x8x81xbf16> to vector<8x81xbf16>
    %c1_272 = arith.constant 1 : index
    %c0_273 = arith.constant 0 : index
    %c10_274 = arith.constant 10 : index
    %214 = vector.load %arg11[%c1_272, %c0_273, %c10_274] : memref<4x8x101xbf16, #tpu.memory_space<vmem>>, vector<1x8x81xbf16>
    %215 = vector.shape_cast %214 : vector<1x8x81xbf16> to vector<8x81xbf16>
    %c3_275 = arith.constant 3 : index
    %c0_276 = arith.constant 0 : index
    %c9_277 = arith.constant 9 : index
    %216 = vector.load %arg11[%c3_275, %c0_276, %c9_277] : memref<4x8x101xbf16, #tpu.memory_space<vmem>>, vector<1x8x81xbf16>
    %217 = vector.shape_cast %216 : vector<1x8x81xbf16> to vector<8x81xbf16>
    %c2_278 = arith.constant 2 : index
    %c0_279 = arith.constant 0 : index
    %c10_280 = arith.constant 10 : index
    %218 = vector.load %arg11[%c2_278, %c0_279, %c10_280] : memref<4x8x101xbf16, #tpu.memory_space<vmem>>, vector<1x8x81xbf16>
    %219 = vector.shape_cast %218 : vector<1x8x81xbf16> to vector<8x81xbf16>
    %c3_281 = arith.constant 3 : index
    %c0_282 = arith.constant 0 : index
    %c10_283 = arith.constant 10 : index
    %220 = vector.load %arg11[%c3_281, %c0_282, %c10_283] : memref<4x8x101xbf16, #tpu.memory_space<vmem>>, vector<1x8x81xbf16>
    %221 = vector.shape_cast %220 : vector<1x8x81xbf16> to vector<8x81xbf16>
    %c1_284 = arith.constant 1 : index
    %c0_285 = arith.constant 0 : index
    %c18_286 = arith.constant 18 : index
    %222 = vector.load %arg11[%c1_284, %c0_285, %c18_286] : memref<4x8x101xbf16, #tpu.memory_space<vmem>>, vector<1x8x81xbf16>
    %223 = vector.shape_cast %222 : vector<1x8x81xbf16> to vector<8x81xbf16>
    %c0_287 = arith.constant 0 : index
    %c0_288 = arith.constant 0 : index
    %c19_289 = arith.constant 19 : index
    %224 = vector.load %arg11[%c0_287, %c0_288, %c19_289] : memref<4x8x101xbf16, #tpu.memory_space<vmem>>, vector<1x8x81xbf16>
    %225 = vector.shape_cast %224 : vector<1x8x81xbf16> to vector<8x81xbf16>
    %c1_290 = arith.constant 1 : index
    %c0_291 = arith.constant 0 : index
    %c19_292 = arith.constant 19 : index
    %226 = vector.load %arg11[%c1_290, %c0_291, %c19_292] : memref<4x8x101xbf16, #tpu.memory_space<vmem>>, vector<1x8x81xbf16>
    %227 = vector.shape_cast %226 : vector<1x8x81xbf16> to vector<8x81xbf16>
    %228 = tpu.concatenate %211, %213, %215, %217, %219, %221, %223, %225, %227 in 0 : vector<8x81xbf16>, vector<8x81xbf16>, vector<8x81xbf16>, vector<8x81xbf16>, vector<8x81xbf16>, vector<8x81xbf16>, vector<8x81xbf16>, vector<8x81xbf16>, vector<8x81xbf16> -> vector<72x81xbf16>
    %cst_293 = arith.constant dense<0.000000e+00> : vector<8x81xf32>
    %229 = tpu.matmul %10, %228, %cst_293 {dimension_numbers = #tpu.dot_dimension_numbers<[1], [0], [0], [1], [0, 0, 1, 1], [], []>} : vector<8x72xbf16>, vector<72x81xbf16>, vector<8x81xf32> -> vector<8x81xf32>
    %230 = vector.broadcast %11 : vector<8x1xf32> to vector<8x81xf32>
    %231 = arith.addf %229, %230 : vector<8x81xf32>
    %cst_294 = arith.constant 0.000000e+00 : f32
    %232 = vector.broadcast %cst_294 : f32 to vector<8x81xf32>
    %233 = arith.maximumf %231, %232 : vector<8x81xf32>
    %c2_295 = arith.constant 2 : index
    %c0_296 = arith.constant 0 : index
    %c0_297 = arith.constant 0 : index
    %234 = vector.load %arg2[%c2_295, %c0_296, %c0_297] : memref<4x1x81xf32, #tpu.memory_space<vmem>>, vector<1x1x81xf32>
    %235 = vector.shape_cast %234 : vector<1x1x81xf32> to vector<1x81xf32>
    %236 = vector.broadcast %235 : vector<1x81xf32> to vector<8x81xf32>
    %237 = arith.mulf %233, %236 : vector<8x81xf32>
    %c0_298 = arith.constant 0 : index
    %c2_299 = arith.constant 2 : index
    %c0_300 = arith.constant 0 : index
    %c0_301 = arith.constant 0 : index
    %238 = vector.load %arg9[%c0_298, %c2_299, %c0_300, %c0_301] : memref<1x4x8x81xf32, #tpu.memory_space<vmem>>, vector<1x1x8x81xf32>
    %239 = vector.shape_cast %238 : vector<1x1x8x81xf32> to vector<8x81xf32>
    %240 = vector.shape_cast %237 : vector<8x81xf32> to vector<1x1x8x81xf32>
    tpu.vector_store %arg9[%c0_298, %c2_299, %c0_300, %c0_301], %240 {strides = array<i32>} : memref<1x4x8x81xf32, #tpu.memory_space<vmem>>, vector<1x1x8x81xf32>,
    %241 = arith.truncf %237 : vector<8x81xf32> to vector<8x81xbf16>
    %c2_302 = arith.constant 2 : index
    %c0_303 = arith.constant 0 : index
    %c10_304 = arith.constant 10 : index
    %242 = vector.load %arg12[%c2_302, %c0_303, %c10_304] : memref<4x8x101xbf16, #tpu.memory_space<vmem>>, vector<1x8x81xbf16>
    %243 = vector.shape_cast %242 : vector<1x8x81xbf16> to vector<8x81xbf16>
    %244 = vector.shape_cast %241 : vector<8x81xbf16> to vector<1x8x81xbf16>
    tpu.vector_store %arg12[%c2_302, %c0_303, %c10_304], %244 {strides = array<i32>} : memref<4x8x101xbf16, #tpu.memory_space<vmem>>, vector<1x8x81xbf16>,
    %c0_305 = arith.constant 0 : index
    %c0_306 = arith.constant 0 : index
    %c10_307 = arith.constant 10 : index
    %245 = vector.load %arg11[%c0_305, %c0_306, %c10_307] : memref<4x8x101xbf16, #tpu.memory_space<vmem>>, vector<1x8x81xbf16>
    %246 = vector.shape_cast %245 : vector<1x8x81xbf16> to vector<8x81xbf16>
    %c1_308 = arith.constant 1 : index
    %c0_309 = arith.constant 0 : index
    %c10_310 = arith.constant 10 : index
    %247 = vector.load %arg11[%c1_308, %c0_309, %c10_310] : memref<4x8x101xbf16, #tpu.memory_space<vmem>>, vector<1x8x81xbf16>
    %248 = vector.shape_cast %247 : vector<1x8x81xbf16> to vector<8x81xbf16>
    %c0_311 = arith.constant 0 : index
    %c0_312 = arith.constant 0 : index
    %c11_313 = arith.constant 11 : index
    %249 = vector.load %arg11[%c0_311, %c0_312, %c11_313] : memref<4x8x101xbf16, #tpu.memory_space<vmem>>, vector<1x8x81xbf16>
    %250 = vector.shape_cast %249 : vector<1x8x81xbf16> to vector<8x81xbf16>
    %c2_314 = arith.constant 2 : index
    %c0_315 = arith.constant 0 : index
    %c10_316 = arith.constant 10 : index
    %251 = vector.load %arg11[%c2_314, %c0_315, %c10_316] : memref<4x8x101xbf16, #tpu.memory_space<vmem>>, vector<1x8x81xbf16>
    %252 = vector.shape_cast %251 : vector<1x8x81xbf16> to vector<8x81xbf16>
    %c3_317 = arith.constant 3 : index
    %c0_318 = arith.constant 0 : index
    %c10_319 = arith.constant 10 : index
    %253 = vector.load %arg11[%c3_317, %c0_318, %c10_319] : memref<4x8x101xbf16, #tpu.memory_space<vmem>>, vector<1x8x81xbf16>
    %254 = vector.shape_cast %253 : vector<1x8x81xbf16> to vector<8x81xbf16>
    %c2_320 = arith.constant 2 : index
    %c0_321 = arith.constant 0 : index
    %c11_322 = arith.constant 11 : index
    %255 = vector.load %arg11[%c2_320, %c0_321, %c11_322] : memref<4x8x101xbf16, #tpu.memory_space<vmem>>, vector<1x8x81xbf16>
    %256 = vector.shape_cast %255 : vector<1x8x81xbf16> to vector<8x81xbf16>
    %c0_323 = arith.constant 0 : index
    %c0_324 = arith.constant 0 : index
    %c19_325 = arith.constant 19 : index
    %257 = vector.load %arg11[%c0_323, %c0_324, %c19_325] : memref<4x8x101xbf16, #tpu.memory_space<vmem>>, vector<1x8x81xbf16>
    %258 = vector.shape_cast %257 : vector<1x8x81xbf16> to vector<8x81xbf16>
    %c1_326 = arith.constant 1 : index
    %c0_327 = arith.constant 0 : index
    %c19_328 = arith.constant 19 : index
    %259 = vector.load %arg11[%c1_326, %c0_327, %c19_328] : memref<4x8x101xbf16, #tpu.memory_space<vmem>>, vector<1x8x81xbf16>
    %260 = vector.shape_cast %259 : vector<1x8x81xbf16> to vector<8x81xbf16>
    %c0_329 = arith.constant 0 : index
    %c0_330 = arith.constant 0 : index
    %c20_331 = arith.constant 20 : index
    %261 = vector.load %arg11[%c0_329, %c0_330, %c20_331] : memref<4x8x101xbf16, #tpu.memory_space<vmem>>, vector<1x8x81xbf16>
    %262 = vector.shape_cast %261 : vector<1x8x81xbf16> to vector<8x81xbf16>
    %263 = tpu.concatenate %246, %248, %250, %252, %254, %256, %258, %260, %262 in 0 : vector<8x81xbf16>, vector<8x81xbf16>, vector<8x81xbf16>, vector<8x81xbf16>, vector<8x81xbf16>, vector<8x81xbf16>, vector<8x81xbf16>, vector<8x81xbf16>, vector<8x81xbf16> -> vector<72x81xbf16>
    %cst_332 = arith.constant dense<0.000000e+00> : vector<8x81xf32>
    %264 = tpu.matmul %10, %263, %cst_332 {dimension_numbers = #tpu.dot_dimension_numbers<[1], [0], [0], [1], [0, 0, 1, 1], [], []>} : vector<8x72xbf16>, vector<72x81xbf16>, vector<8x81xf32> -> vector<8x81xf32>
    %265 = vector.broadcast %11 : vector<8x1xf32> to vector<8x81xf32>
    %266 = arith.addf %264, %265 : vector<8x81xf32>
    %cst_333 = arith.constant 0.000000e+00 : f32
    %267 = vector.broadcast %cst_333 : f32 to vector<8x81xf32>
    %268 = arith.maximumf %266, %267 : vector<8x81xf32>
    %c3_334 = arith.constant 3 : index
    %c0_335 = arith.constant 0 : index
    %c0_336 = arith.constant 0 : index
    %269 = vector.load %arg2[%c3_334, %c0_335, %c0_336] : memref<4x1x81xf32, #tpu.memory_space<vmem>>, vector<1x1x81xf32>
    %270 = vector.shape_cast %269 : vector<1x1x81xf32> to vector<1x81xf32>
    %271 = vector.broadcast %270 : vector<1x81xf32> to vector<8x81xf32>
    %272 = arith.mulf %268, %271 : vector<8x81xf32>
    %c0_337 = arith.constant 0 : index
    %c3_338 = arith.constant 3 : index
    %c0_339 = arith.constant 0 : index
    %c0_340 = arith.constant 0 : index
    %273 = vector.load %arg9[%c0_337, %c3_338, %c0_339, %c0_340] : memref<1x4x8x81xf32, #tpu.memory_space<vmem>>, vector<1x1x8x81xf32>
    %274 = vector.shape_cast %273 : vector<1x1x8x81xf32> to vector<8x81xf32>
    %275 = vector.shape_cast %272 : vector<8x81xf32> to vector<1x1x8x81xf32>
    tpu.vector_store %arg9[%c0_337, %c3_338, %c0_339, %c0_340], %275 {strides = array<i32>} : memref<1x4x8x81xf32, #tpu.memory_space<vmem>>, vector<1x1x8x81xf32>,
    %276 = arith.truncf %272 : vector<8x81xf32> to vector<8x81xbf16>
    %c3_341 = arith.constant 3 : index
    %c0_342 = arith.constant 0 : index
    %c10_343 = arith.constant 10 : index
    %277 = vector.load %arg12[%c3_341, %c0_342, %c10_343] : memref<4x8x101xbf16, #tpu.memory_space<vmem>>, vector<1x8x81xbf16>
    %278 = vector.shape_cast %277 : vector<1x8x81xbf16> to vector<8x81xbf16>
    %279 = vector.shape_cast %276 : vector<8x81xbf16> to vector<1x8x81xbf16>
    tpu.vector_store %arg12[%c3_341, %c0_342, %c10_343], %279 {strides = array<i32>} : memref<4x8x101xbf16, #tpu.memory_space<vmem>>, vector<1x8x81xbf16>,
    %c0_344 = arith.constant 0 : index
    %c0_345 = arith.constant 0 : index
    %c10_346 = arith.constant 10 : index
    %280 = vector.load %arg12[%c0_344, %c0_345, %c10_346] : memref<4x8x101xbf16, #tpu.memory_space<vmem>>, vector<1x8x72xbf16>
    %281 = vector.shape_cast %280 : vector<1x8x72xbf16> to vector<8x72xbf16>
    %c1_347 = arith.constant 1 : index
    %c0_348 = arith.constant 0 : index
    %c10_349 = arith.constant 10 : index
    %282 = vector.load %arg12[%c1_347, %c0_348, %c10_349] : memref<4x8x101xbf16, #tpu.memory_space<vmem>>, vector<1x8x72xbf16>
    %283 = vector.shape_cast %282 : vector<1x8x72xbf16> to vector<8x72xbf16>
    %c0_350 = arith.constant 0 : index
    %c0_351 = arith.constant 0 : index
    %c11_352 = arith.constant 11 : index
    %284 = vector.load %arg12[%c0_350, %c0_351, %c11_352] : memref<4x8x101xbf16, #tpu.memory_space<vmem>>, vector<1x8x72xbf16>
    %285 = vector.shape_cast %284 : vector<1x8x72xbf16> to vector<8x72xbf16>
    %c2_353 = arith.constant 2 : index
    %c0_354 = arith.constant 0 : index
    %c10_355 = arith.constant 10 : index
    %286 = vector.load %arg12[%c2_353, %c0_354, %c10_355] : memref<4x8x101xbf16, #tpu.memory_space<vmem>>, vector<1x8x72xbf16>
    %287 = vector.shape_cast %286 : vector<1x8x72xbf16> to vector<8x72xbf16>
    %c3_356 = arith.constant 3 : index
    %c0_357 = arith.constant 0 : index
    %c10_358 = arith.constant 10 : index
    %288 = vector.load %arg12[%c3_356, %c0_357, %c10_358] : memref<4x8x101xbf16, #tpu.memory_space<vmem>>, vector<1x8x72xbf16>
    %289 = vector.shape_cast %288 : vector<1x8x72xbf16> to vector<8x72xbf16>
    %c2_359 = arith.constant 2 : index
    %c0_360 = arith.constant 0 : index
    %c11_361 = arith.constant 11 : index
    %290 = vector.load %arg12[%c2_359, %c0_360, %c11_361] : memref<4x8x101xbf16, #tpu.memory_space<vmem>>, vector<1x8x72xbf16>
    %291 = vector.shape_cast %290 : vector<1x8x72xbf16> to vector<8x72xbf16>
    %c0_362 = arith.constant 0 : index
    %c0_363 = arith.constant 0 : index
    %c19_364 = arith.constant 19 : index
    %292 = vector.load %arg12[%c0_362, %c0_363, %c19_364] : memref<4x8x101xbf16, #tpu.memory_space<vmem>>, vector<1x8x72xbf16>
    %293 = vector.shape_cast %292 : vector<1x8x72xbf16> to vector<8x72xbf16>
    %c1_365 = arith.constant 1 : index
    %c0_366 = arith.constant 0 : index
    %c19_367 = arith.constant 19 : index
    %294 = vector.load %arg12[%c1_365, %c0_366, %c19_367] : memref<4x8x101xbf16, #tpu.memory_space<vmem>>, vector<1x8x72xbf16>
    %295 = vector.shape_cast %294 : vector<1x8x72xbf16> to vector<8x72xbf16>
    %c0_368 = arith.constant 0 : index
    %c0_369 = arith.constant 0 : index
    %c20_370 = arith.constant 20 : index
    %296 = vector.load %arg12[%c0_368, %c0_369, %c20_370] : memref<4x8x101xbf16, #tpu.memory_space<vmem>>, vector<1x8x72xbf16>
    %297 = vector.shape_cast %296 : vector<1x8x72xbf16> to vector<8x72xbf16>
    %298 = tpu.concatenate %281, %283, %285, %287, %289, %291, %293, %295, %297 in 0 : vector<8x72xbf16>, vector<8x72xbf16>, vector<8x72xbf16>, vector<8x72xbf16>, vector<8x72xbf16>, vector<8x72xbf16>, vector<8x72xbf16>, vector<8x72xbf16>, vector<8x72xbf16> -> vector<72x72xbf16>
    %c0_371 = arith.constant 0 : index
    %c0_372 = arith.constant 0 : index
    %299 = vector.load %arg7[%c0_371, %c0_372] : memref<8x72xbf16, #tpu.memory_space<vmem>>, vector<8x72xbf16>
    %cst_373 = arith.constant dense<0.000000e+00> : vector<8x72xf32>
    %300 = tpu.matmul %299, %298, %cst_373 {dimension_numbers = #tpu.dot_dimension_numbers<[1], [0], [0], [1], [0, 0, 1, 1], [], []>} : vector<8x72xbf16>, vector<72x72xbf16>, vector<8x72xf32> -> vector<8x72xf32>
    %c0_374 = arith.constant 0 : index
    %c0_375 = arith.constant 0 : index
    %301 = vector.load %arg8[%c0_374, %c0_375] : memref<8x1xf32, #tpu.memory_space<vmem>>, vector<8x1xf32>
    %302 = vector.broadcast %301 : vector<8x1xf32> to vector<8x72xf32>
    %303 = arith.addf %300, %302 : vector<8x72xf32>
    %cst_376 = arith.constant 0.000000e+00 : f32
    %304 = vector.broadcast %cst_376 : f32 to vector<8x72xf32>
    %305 = arith.maximumf %303, %304 : vector<8x72xf32>
    %c0_377 = arith.constant 0 : index
    %c0_378 = arith.constant 0 : index
    %c0_379 = arith.constant 0 : index
    %306 = vector.load %arg10[%c0_377, %c0_378, %c0_379] : memref<1x8x72xf32, #tpu.memory_space<vmem>>, vector<1x8x72xf32>
    %307 = vector.shape_cast %306 : vector<1x8x72xf32> to vector<8x72xf32>
    %308 = vector.shape_cast %305 : vector<8x72xf32> to vector<1x8x72xf32>
    tpu.vector_store %arg10[%c0_377, %c0_378, %c0_379], %308 {strides = array<i32>} : memref<1x8x72xf32, #tpu.memory_space<vmem>>, vector<1x8x72xf32>,
    return
  }
  func.func @transform_0(%arg0: i32) -> (i32, i32, i32, i32) {
    %c0_i32 = arith.constant 0 : i32
    %c0_i32_0 = arith.constant 0 : i32
    %c0_i32_1 = arith.constant 0 : i32
    %c0_i32_2 = arith.constant 0 : i32
    return %arg0, %c0_i32, %c0_i32_0, %c0_i32_1 : i32, i32, i32, i32
  }
  func.func @transform_1(%arg0: i32) -> (i32, i32, i32) {
    %c0_i32 = arith.constant 0 : i32
    %c0_i32_0 = arith.constant 0 : i32
    %c0_i32_1 = arith.constant 0 : i32
    %c0_i32_2 = arith.constant 0 : i32
    return %c0_i32, %c0_i32_0, %c0_i32_1 : i32, i32, i32
  }
  func.func @transform_2(%arg0: i32) -> (i32, i32) {
    %c0_i32 = arith.constant 0 : i32
    %c0_i32_0 = arith.constant 0 : i32
    %c0_i32_1 = arith.constant 0 : i32
    return %c0_i32, %c0_i32_0 : i32, i32
  }
  func.func @transform_3(%arg0: i32) -> (i32, i32) {
    %c0_i32 = arith.constant 0 : i32
    %c0_i32_0 = arith.constant 0 : i32
    %c0_i32_1 = arith.constant 0 : i32
    return %c0_i32, %c0_i32_0 : i32, i32
  }
  func.func @transform_4(%arg0: i32) -> (i32, i32) {
    %c0_i32 = arith.constant 0 : i32
    %c0_i32_0 = arith.constant 0 : i32
    %c0_i32_1 = arith.constant 0 : i32
    return %c0_i32, %c0_i32_0 : i32, i32
  }
  func.func @transform_5(%arg0: i32) -> (i32, i32) {
    %c0_i32 = arith.constant 0 : i32
    %c0_i32_0 = arith.constant 0 : i32
    %c0_i32_1 = arith.constant 0 : i32
    return %c0_i32, %c0_i32_0 : i32, i32
  }
  func.func @transform_6(%arg0: i32) -> (i32, i32) {
    %c0_i32 = arith.constant 0 : i32
    %c0_i32_0 = arith.constant 0 : i32
    %c0_i32_1 = arith.constant 0 : i32
    return %c0_i32, %c0_i32_0 : i32, i32
  }
  func.func @transform_7(%arg0: i32) -> (i32, i32) {
    %c0_i32 = arith.constant 0 : i32
    %c0_i32_0 = arith.constant 0 : i32
    %c0_i32_1 = arith.constant 0 : i32
    return %c0_i32, %c0_i32_0 : i32, i32
  }
  func.func @transform_8(%arg0: i32) -> (i32, i32, i32, i32) {
    %c0_i32 = arith.constant 0 : i32
    %c0_i32_0 = arith.constant 0 : i32
    %c0_i32_1 = arith.constant 0 : i32
    %c0_i32_2 = arith.constant 0 : i32
    return %arg0, %c0_i32, %c0_i32_0, %c0_i32_1 : i32, i32, i32, i32
  }
  func.func @transform_9(%arg0: i32) -> (i32, i32, i32) {
    %c0_i32 = arith.constant 0 : i32
    %c0_i32_0 = arith.constant 0 : i32
    %c0_i32_1 = arith.constant 0 : i32
    return %arg0, %c0_i32, %c0_i32_0 : i32, i32, i32
  }
}

</mosaic_0001>

<llo_original>
// kernel: downsample_forward.1
$region0: #{downsample_forward.1}
  #allocation0 [shape = 'u32[]', space=smem, size = 0x4, offset = 0x4, fixed_abs, tag = 'smem constant byte address 0x4 - core index']
  #allocation1 [shape = 'u32[72,128]{1,0:T(1,128)}', space=vmem, size = 0x9000, scoped, tag = 'internal scratch']
  #allocation2 [shape = 'bf16[4,8,101]{2,1,0:T(8,128)(2,1)}', space=vmem, size = 0x2000, scoped, tag = 'scratch operand']
  #allocation3 [shape = 'bf16[4,8,101]{2,1,0:T(8,128)(2,1)}', space=vmem, size = 0x2000, scoped, tag = 'scratch operand']
  %s0 = inlined_call_operand.vmem [shape: bf16[2,4,4,101], index: 0, kind: input, shape index: {}]
  %s1 = inlined_call_operand.vmem [shape: f32[4,1,81], index: 1, kind: input, shape index: {}]
  %s2 = inlined_call_operand.vmem [shape: bf16[8,36], index: 2, kind: input, shape index: {}]
  %s3 = inlined_call_operand.vmem [shape: f32[8,1], index: 3, kind: input, shape index: {}]
  %s4 = inlined_call_operand.vmem [shape: bf16[8,72], index: 4, kind: input, shape index: {}]
  %s5 = inlined_call_operand.vmem [shape: f32[8,1], index: 5, kind: input, shape index: {}]
  %s6 = inlined_call_operand.vmem [shape: bf16[8,72], index: 6, kind: input, shape index: {}]
  %s7 = inlined_call_operand.vmem [shape: f32[8,1], index: 7, kind: input, shape index: {}]
  %s8 = inlined_call_operand.vmem [shape: f32[2,4,8,81], index: 8, kind: output, shape index: {0}]
  %s9 = inlined_call_operand.vmem [shape: f32[2,8,72], index: 9, kind: output, shape index: {1}]
  %10 = xla_tuple %s8, %s9
  %s11 = sld [smem:[#allocation0]]
  $region73: #{downsample_forward.1} parent=0
    _
  %s13 = ssub.s32 1, %s11
  %s14 = scalar_select 0, %s13, %s11
  loop: start=0, step=1, limit=4
  $region2: #{downsample_forward.1} parent=0 // loop_pre_header
    _
  $region3: #{downsample_forward.1} parent=0 // loop_header
    %s16 = sphi 0, %s20
    %p17 = scmp.ge.s32.totalorder %s16, 4
    %s26 = sphi 0, %s28
    %s29 = sphi 0, %s26
    %s30 = sphi 0, %s29
    %s46 = sphi 0, %s30
    %s50 = sphi 0, %s50
    %s52 = sphi 0, %s50
    %s53 = sphi 0, %s52
    %s67 = sphi 0, %s53
    %s71 = sphi 0, %s71
    %s73 = sphi 0, %s71
    %s74 = sphi 0, %s73
    %s88 = sphi 0, %s74
    %s92 = sphi 0, %s92
    %s94 = sphi 0, %s92
    %s95 = sphi 0, %s94
    %s109 = sphi 0, %s95
    %s113 = sphi 0, %s113
    %s115 = sphi 0, %s113
    %s116 = sphi 0, %s115
    %s130 = sphi 0, %s116
    %s134 = sphi 0, %s134
    %s136 = sphi 0, %s134
    %s137 = sphi 0, %s136
    %s151 = sphi 0, %s137
    %s155 = sphi 0, %s155
    %s157 = sphi 0, %s155
    %s158 = sphi 0, %s157
    %s172 = sphi 0, %s158
    %s176 = sphi 0, %s176
    %s178 = sphi 0, %s176
    %s179 = sphi 0, %s178
    %s193 = sphi 0, %s179
    %s199 = sphi 0, %s201
    %s202 = sphi 0, %s199
    %s203 = sphi 0, %s202
    %s219 = sphi 0, %s203
    %s225 = sphi 0, %s227
    %s228 = sphi 0, %s225
    %s229 = sphi 0, %s228
    %s245 = sphi 0, %s229
  $region4: #{downsample_forward.1} parent=0 // loop_header_branch
    %19 = sbr.rel (%p17) target = $region8
  $region5: #{downsample_forward.1} parent=0 // loop_body
    %s21 = ssub.s32 %s16, 1
    %s22 = ssub.s32 %s16, 2
    %s23 = sadd.s32 %s16, 1
    %s24 = ssub.s32 %s16, %s23
    %p25 = scmp.eq.s32.totalorder %s24, 0
    %s27 = sadd.s32 %s26, 1
    %s28 = scalar_select %p25, %s26, %s27
    %p31 = pneg %p25
    %p32 = scmp.eq.s32.totalorder %s16, 1
    %p33 = por %p31, %p32
    %p34 = scmp.ne.s32.totalorder %s26, %s29
    %p35 = scmp.eq.s32.totalorder %s16, 0
    %p36 = por %p34, %p35
    %p37 = scmp.ne.s32.totalorder %s26, %s29
    %p38 = scmp.eq.s32.totalorder %s21, 1
    %p39 = por %p37, %p38
    %p40 = scmp.ne.s32.totalorder %s29, %s30
    %p41 = scmp.eq.s32.totalorder %s21, 0
    %p42 = por %p40, %p41
    %p43 = scmp.ne.s32.totalorder %s29, %s30
    %p44 = scmp.eq.s32.totalorder %s22, 1
    %p45 = por %p43, %p44
    %p47 = scmp.ne.s32.totalorder %s30, %s46
    %p48 = scmp.eq.s32.totalorder %s22, 0
    %p49 = por %p47, %p48
    %s51 = sadd.s32 %s50, 1
    %p54 = scmp.eq.s32.totalorder %s16, 1
    %p55 = scmp.ne.s32.totalorder %s50, %s52
    %p56 = scmp.eq.s32.totalorder %s16, 0
    %p57 = por %p55, %p56
    %p58 = scmp.ne.s32.totalorder %s50, %s52
    %p59 = scmp.eq.s32.totalorder %s21, 1
    %p60 = por %p58, %p59
    %p61 = scmp.ne.s32.totalorder %s52, %s53
    %p62 = scmp.eq.s32.totalorder %s21, 0
    %p63 = por %p61, %p62
    %p64 = scmp.ne.s32.totalorder %s52, %s53
    %p65 = scmp.eq.s32.totalorder %s22, 1
    %p66 = por %p64, %p65
    %p68 = scmp.ne.s32.totalorder %s53, %s67
    %p69 = scmp.eq.s32.totalorder %s22, 0
    %p70 = por %p68, %p69
    %s72 = sadd.s32 %s71, 1
    %p75 = scmp.eq.s32.totalorder %s16, 1
    %p76 = scmp.ne.s32.totalorder %s71, %s73
    %p77 = scmp.eq.s32.totalorder %s16, 0
    %p78 = por %p76, %p77
    %p79 = scmp.ne.s32.totalorder %s71, %s73
    %p80 = scmp.eq.s32.totalorder %s21, 1
    %p81 = por %p79, %p80
    %p82 = scmp.ne.s32.totalorder %s73, %s74
    %p83 = scmp.eq.s32.totalorder %s21, 0
    %p84 = por %p82, %p83
    %p85 = scmp.ne.s32.totalorder %s73, %s74
    %p86 = scmp.eq.s32.totalorder %s22, 1
    %p87 = por %p85, %p86
    %p89 = scmp.ne.s32.totalorder %s74, %s88
    %p90 = scmp.eq.s32.totalorder %s22, 0
    %p91 = por %p89, %p90
    %s93 = sadd.s32 %s92, 1
    %p96 = scmp.eq.s32.totalorder %s16, 1
    %p97 = scmp.ne.s32.totalorder %s92, %s94
    %p98 = scmp.eq.s32.totalorder %s16, 0
    %p99 = por %p97, %p98
    %p100 = scmp.ne.s32.totalorder %s92, %s94
    %p101 = scmp.eq.s32.totalorder %s21, 1
    %p102 = por %p100, %p101
    %p103 = scmp.ne.s32.totalorder %s94, %s95
    %p104 = scmp.eq.s32.totalorder %s21, 0
    %p105 = por %p103, %p104
    %p106 = scmp.ne.s32.totalorder %s94, %s95
    %p107 = scmp.eq.s32.totalorder %s22, 1
    %p108 = por %p106, %p107
    %p110 = scmp.ne.s32.totalorder %s95, %s109
    %p111 = scmp.eq.s32.totalorder %s22, 0
    %p112 = por %p110, %p111
    %s114 = sadd.s32 %s113, 1
    %p117 = scmp.eq.s32.totalorder %s16, 1
    %p118 = scmp.ne.s32.totalorder %s113, %s115
    %p119 = scmp.eq.s32.totalorder %s16, 0
    %p120 = por %p118, %p119
    %p121 = scmp.ne.s32.totalorder %s113, %s115
    %p122 = scmp.eq.s32.totalorder %s21, 1
    %p123 = por %p121, %p122
    %p124 = scmp.ne.s32.totalorder %s115, %s116
    %p125 = scmp.eq.s32.totalorder %s21, 0
    %p126 = por %p124, %p125
    %p127 = scmp.ne.s32.totalorder %s115, %s116
    %p128 = scmp.eq.s32.totalorder %s22, 1
    %p129 = por %p127, %p128
    %p131 = scmp.ne.s32.totalorder %s116, %s130
    %p132 = scmp.eq.s32.totalorder %s22, 0
    %p133 = por %p131, %p132
    %s135 = sadd.s32 %s134, 1
    %p138 = scmp.eq.s32.totalorder %s16, 1
    %p139 = scmp.ne.s32.totalorder %s134, %s136
    %p140 = scmp.eq.s32.totalorder %s16, 0
    %p141 = por %p139, %p140
    %p142 = scmp.ne.s32.totalorder %s134, %s136
    %p143 = scmp.eq.s32.totalorder %s21, 1
    %p144 = por %p142, %p143
    %p145 = scmp.ne.s32.totalorder %s136, %s137
    %p146 = scmp.eq.s32.totalorder %s21, 0
    %p147 = por %p145, %p146
    %p148 = scmp.ne.s32.totalorder %s136, %s137
    %p149 = scmp.eq.s32.totalorder %s22, 1
    %p150 = por %p148, %p149
    %p152 = scmp.ne.s32.totalorder %s137, %s151
    %p153 = scmp.eq.s32.totalorder %s22, 0
    %p154 = por %p152, %p153
    %s156 = sadd.s32 %s155, 1
    %p159 = scmp.eq.s32.totalorder %s16, 1
    %p160 = scmp.ne.s32.totalorder %s155, %s157
    %p161 = scmp.eq.s32.totalorder %s16, 0
    %p162 = por %p160, %p161
    %p163 = scmp.ne.s32.totalorder %s155, %s157
    %p164 = scmp.eq.s32.totalorder %s21, 1
    %p165 = por %p163, %p164
    %p166 = scmp.ne.s32.totalorder %s157, %s158
    %p167 = scmp.eq.s32.totalorder %s21, 0
    %p168 = por %p166, %p167
    %p169 = scmp.ne.s32.totalorder %s157, %s158
    %p170 = scmp.eq.s32.totalorder %s22, 1
    %p171 = por %p169, %p170
    %p173 = scmp.ne.s32.totalorder %s158, %s172
    %p174 = scmp.eq.s32.totalorder %s22, 0
    %p175 = por %p173, %p174
    %s177 = sadd.s32 %s176, 1
    %p180 = scmp.eq.s32.totalorder %s16, 1
    %p181 = scmp.ne.s32.totalorder %s176, %s178
    %p182 = scmp.eq.s32.totalorder %s16, 0
    %p183 = por %p181, %p182
    %p184 = scmp.ne.s32.totalorder %s176, %s178
    %p185 = scmp.eq.s32.totalorder %s21, 1
    %p186 = por %p184, %p185
    %p187 = scmp.ne.s32.totalorder %s178, %s179
    %p188 = scmp.eq.s32.totalorder %s21, 0
    %p189 = por %p187, %p188
    %p190 = scmp.ne.s32.totalorder %s178, %s179
    %p191 = scmp.eq.s32.totalorder %s22, 1
    %p192 = por %p190, %p191
    %p194 = scmp.ne.s32.totalorder %s179, %s193
    %p195 = scmp.eq.s32.totalorder %s22, 0
    %p196 = por %p194, %p195
    %s197 = ssub.s32 %s16, %s23
    %p198 = scmp.eq.s32.totalorder %s197, 0
    %s200 = sadd.s32 %s199, 1
    %s201 = scalar_select %p198, %s199, %s200
    %p204 = pneg %p198
    %p205 = scmp.eq.s32.totalorder %s16, 1
    %p206 = por %p204, %p205
    %p207 = scmp.ne.s32.totalorder %s199, %s202
    %p208 = scmp.eq.s32.totalorder %s16, 0
    %p209 = por %p207, %p208
    %p210 = scmp.ne.s32.totalorder %s199, %s202
    %p211 = scmp.eq.s32.totalorder %s21, 1
    %p212 = por %p210, %p211
    %p213 = scmp.ne.s32.totalorder %s202, %s203
    %p214 = scmp.eq.s32.totalorder %s21, 0
    %p215 = por %p213, %p214
    %p216 = scmp.ne.s32.totalorder %s202, %s203
    %p217 = scmp.eq.s32.totalorder %s22, 1
    %p218 = por %p216, %p217
    %p220 = scmp.ne.s32.totalorder %s203, %s219
    %p221 = scmp.eq.s32.totalorder %s22, 0
    %p222 = por %p220, %p221
    %s223 = ssub.s32 %s16, %s23
    %p224 = scmp.eq.s32.totalorder %s223, 0
    %s226 = sadd.s32 %s225, 1
    %s227 = scalar_select %p224, %s225, %s226
    %p230 = pneg %p224
    %p231 = scmp.eq.s32.totalorder %s16, 1
    %p232 = por %p230, %p231
    %p233 = scmp.ne.s32.totalorder %s225, %s228
    %p234 = scmp.eq.s32.totalorder %s16, 0
    %p235 = por %p233, %p234
    %p236 = scmp.ne.s32.totalorder %s225, %s228
    %p237 = scmp.eq.s32.totalorder %s21, 1
    %p238 = por %p236, %p237
    %p239 = scmp.ne.s32.totalorder %s228, %s229
    %p240 = scmp.eq.s32.totalorder %s21, 0
    %p241 = por %p239, %p240
    %p242 = scmp.ne.s32.totalorder %s228, %s229
    %p243 = scmp.eq.s32.totalorder %s22, 1
    %p244 = por %p242, %p243
    %p246 = scmp.ne.s32.totalorder %s229, %s245
    %p247 = scmp.eq.s32.totalorder %s22, 0
    %p248 = por %p246, %p247
    %p249 = scmp.le.s32.totalorder 1, %s16
    %p250 = scmp.lt.s32.totalorder %s16, 3
    %p251 = pnand %p249, %p250
    %p252 = pneg %p251
    // Predicated region
    $region9: #{downsample_forward.1} parent=5 // pred_check
      _
    $region10: #{downsample_forward.1} parent=5 // pred_check_branch
      %254 = sbr.rel (%p251) target = $region12
    $region11: #{downsample_forward.1} parent=5 // pred_region
      %s255 = ssub.s32 %s16, 1
      // Predicated region
      $region13: #{downsample_forward.1} parent=11 // pred_check
        %p256 = pneg %p63
      $region14: #{downsample_forward.1} parent=11 // pred_check_branch
        %258 = sbr.rel (%p256) target = $region16
      $region15: #{downsample_forward.1} parent=11 // pred_region
        _
      $region16: #{downsample_forward.1} parent=11 // pred_fallthru
        _
      // Predicated region
      $region17: #{downsample_forward.1} parent=11 // pred_check
        %p259 = pneg %p84
      $region18: #{downsample_forward.1} parent=11 // pred_check_branch
        %261 = sbr.rel (%p259) target = $region20
      $region19: #{downsample_forward.1} parent=11 // pred_region
        _
      $region20: #{downsample_forward.1} parent=11 // pred_fallthru
        _
      // Predicated region
      $region21: #{downsample_forward.1} parent=11 // pred_check
        %p262 = pneg %p105
      $region22: #{downsample_forward.1} parent=11 // pred_check_branch
        %264 = sbr.rel (%p262) target = $region24
      $region23: #{downsample_forward.1} parent=11 // pred_region
        _
      $region24: #{downsample_forward.1} parent=11 // pred_fallthru
        _
      // Predicated region
      $region25: #{downsample_forward.1} parent=11 // pred_check
        %p265 = pneg %p126
      $region26: #{downsample_forward.1} parent=11 // pred_check_branch
        %267 = sbr.rel (%p265) target = $region28
      $region27: #{downsample_forward.1} parent=11 // pred_region
        _
      $region28: #{downsample_forward.1} parent=11 // pred_fallthru
        _
      // Predicated region
      $region29: #{downsample_forward.1} parent=11 // pred_check
        %p268 = pneg %p147
      $region30: #{downsample_forward.1} parent=11 // pred_check_branch
        %270 = sbr.rel (%p268) target = $region32
      $region31: #{downsample_forward.1} parent=11 // pred_region
        _
      $region32: #{downsample_forward.1} parent=11 // pred_fallthru
        _
      // Predicated region
      $region33: #{downsample_forward.1} parent=11 // pred_check
        %p271 = pneg %p168
      $region34: #{downsample_forward.1} parent=11 // pred_check_branch
        %273 = sbr.rel (%p271) target = $region36
      $region35: #{downsample_forward.1} parent=11 // pred_region
        _
      $region36: #{downsample_forward.1} parent=11 // pred_fallthru
        _
      // Predicated region
      $region37: #{downsample_forward.1} parent=11 // pred_check
        %p274 = pneg %p189
      $region38: #{downsample_forward.1} parent=11 // pred_check_branch
        %276 = sbr.rel (%p274) target = $region40
      $region39: #{downsample_forward.1} parent=11 // pred_region
        _
      $region40: #{downsample_forward.1} parent=11 // pred_fallthru
        _
    $region12: #{downsample_forward.1} parent=5 // pred_fallthru
      _
    %p277 = scmp.lt.s32.totalorder %s16, 2
    // Predicated region
    $region41: #{downsample_forward.1} parent=5 // pred_check
      %p278 = pneg %p277
    $region42: #{downsample_forward.1} parent=5 // pred_check_branch
      %280 = sbr.rel (%p278) target = $region44
    $region43: #{downsample_forward.1} parent=5 // pred_region
      // Predicated region
      $region45: #{downsample_forward.1} parent=43 // pred_check
        %p281 = pneg %p36
      $region46: #{downsample_forward.1} parent=43 // pred_check_branch
        %283 = sbr.rel (%p281) target = $region48
      $region47: #{downsample_forward.1} parent=43 // pred_region
        %p284 = scmp.lt.s32.totalorder %s16, 1
        %s285 = scalar_select %p284, %s16, 1
        %s286 = smul.addr %s285, 4
        %s287 = smul.addr %s286, 2
        %s288 = scalar_lea.vmem %s0, %s287
      $region48: #{downsample_forward.1} parent=43 // pred_fallthru
        _
    $region44: #{downsample_forward.1} parent=5 // pred_fallthru
      _
    %p289 = scmp.le.s32.totalorder 1, %s16
    %p290 = scmp.lt.s32.totalorder %s16, 3
    %p291 = pnand %p289, %p290
    %p292 = pneg %p291
    // Predicated region
    $region49: #{downsample_forward.1} parent=5 // pred_check
      _
    $region50: #{downsample_forward.1} parent=5 // pred_check_branch
      %294 = sbr.rel (%p291) target = $region52
    $region51: #{downsample_forward.1} parent=5 // pred_region
      %s295 = ssub.s32 %s16, 1
      %p296 = scmp.lt.s32.totalorder %s21, 1
      %s297 = scalar_select %p296, %s21, 1
      %s298 = smul.addr %s297, 4
      %s299 = smul.addr %s298, 2
      %s300 = scalar_lea.vmem %s0, %s299
      %p301 = pneg %p42
      %p302 = pneg %p39
      %p303 = pneg %p63
      %p304 = pneg %p60
      %p305 = pneg %p84
      %p306 = pneg %p81
      %p307 = pneg %p105
      %p308 = pneg %p102
      %p309 = pneg %p126
      %p310 = pneg %p123
      %p311 = pneg %p147
      %p312 = pneg %p144
      %p313 = pneg %p168
      %p314 = pneg %p165
      %p315 = pneg %p189
      %p316 = pneg %p186
      %p317 = pneg %p215
      %p318 = pneg %p212
      %p319 = scmp.lt.s32.totalorder %s21, 1
      %s320 = scalar_select %p319, %s21, 1
      %s321 = smul.addr %s320, 4
      %s322 = smul.addr %s321, 8
      %s323 = scalar_lea.vmem %s8, %s322
      %p324 = pneg %p241
      %p325 = pneg %p238
      %p326 = scmp.lt.s32.totalorder %s21, 1
      %s327 = scalar_select %p326, %s21, 1
      %s328 = smul.addr %s327, 8
      %s329 = scalar_lea.vmem %s9, %s328
      %p330 = scmp.lt.s32.totalorder %s21, 1
      %s331 = scalar_select %p330, %s21, 1
      %s332 = smul.addr %s331, 4
      %s333 = smul.addr %s332, 2
      %s334 = scalar_lea.vmem %s0, %s333
      %p335 = scmp.lt.s32.totalorder %s21, 1
      %s336 = scalar_select %p335, %s21, 1
      %s337 = smul.addr %s336, 4
      %s338 = smul.addr %s337, 8
      %s339 = scalar_lea.vmem %s8, %s338
      %p340 = scmp.lt.s32.totalorder %s21, 1
      %s341 = scalar_select %p340, %s21, 1
      %s342 = smul.addr %s341, 8
      %s343 = scalar_lea.vmem %s9, %s342
      %vm345 = vcmask 76800
      %346 = vst.msk [vmem:[#allocation2] sm:$0xf] %vm345, 0
      %347 = vst.msk [vmem:[#allocation2 + $0x4] sm:$0xf] %vm345, 0
      %348 = vst.msk [vmem:[#allocation2 + $0x8] sm:$0xf] %vm345, 0
      %349 = vst.msk [vmem:[#allocation2 + $0xc] sm:$0xf] %vm345, 0
      %vm350 = vcmask 823000
      %351 = vst.msk [vmem:[#allocation2] sm:$0xf] %vm350, 0
      %352 = vst.msk [vmem:[#allocation2 + $0x4] sm:$0xf] %vm350, 0
      %353 = vst.msk [vmem:[#allocation2 + $0x8] sm:$0xf] %vm350, 0
      %354 = vst.msk [vmem:[#allocation2 + $0xc] sm:$0xf] %vm350, 0
      %355 = vst.msk [vmem:[#allocation3] sm:$0xf] %vm345, 0
      %356 = vst.msk [vmem:[#allocation3 + $0x4] sm:$0xf] %vm345, 0
      %357 = vst.msk [vmem:[#allocation3 + $0x8] sm:$0xf] %vm345, 0
      %358 = vst.msk [vmem:[#allocation3 + $0xc] sm:$0xf] %vm345, 0
      %359 = vst.msk [vmem:[#allocation3] sm:$0xf] %vm350, 0
      %360 = vst.msk [vmem:[#allocation3 + $0x4] sm:$0xf] %vm350, 0
      %361 = vst.msk [vmem:[#allocation3 + $0x8] sm:$0xf] %vm350, 0
      %362 = vst.msk [vmem:[#allocation3 + $0xc] sm:$0xf] %vm350, 0
      %v363 = vld [vmem:[%s2] sm:$0xf]
      %v364 = vld [vmem:[%s3] sm:$0xff]
      %v365 = vld [vmem:[%s4] sm:$0xf]
      %v366 = vld [vmem:[%s5] sm:$0xff]
      %s367 = scalar_lea.vmem %s334, 6
      %v368 = vld [vmem:[%s367] sm:$0x3]
      %s369 = scalar_lea.vmem %s334, 4
      %v370 = vld [vmem:[%s369] sm:$0x3]
      %s371 = scalar_lea.vmem %s334, 2
      %v372 = vld [vmem:[%s371] sm:$0x3]
      %v373 = vld [vmem:[%s334] sm:$0x3]
      %s375 = scalar_lea.vmem [#allocation1], 1
      %376 = vst [vmem:[%s375] ss:$4 sm:$0xff] %v370
      %v377 = vld.sshfl [vmem:[#allocation1] sm:$0xff pattern:$0x73625140]
      %379 = vrot.lane.b32.xlu0 %v377, 127
      %v380 = vpop.permute.xlu0 %379
      %s382 = scalar_lea.vmem [#allocation1], 2
      %383 = vst [vmem:[%s382] ss:$4 sm:$0xff] %v368
      %v384 = vld.sshfl [vmem:[#allocation1] sm:$0xff pattern:$0x73625140]
      %386 = vrot.lane.b32.xlu0 %v384, 127
      %v387 = vpop.permute.xlu0 %386
      %s389 = scalar_lea.vmem [#allocation1], 3
      %390 = vst [vmem:[%s389] ss:$4 sm:$0xff] %v372
      %v391 = vld.sshfl [vmem:[#allocation1] sm:$0xff pattern:$0x73625140]
      %393 = vrot.lane.b32.xlu0 %v391, 119
      %v394 = vpop.permute.xlu0 %393
      %396 = vst [vmem:[#allocation1] ss:$4 sm:$0xff] %v373
      %v397 = vld.sshfl [vmem:[#allocation1] sm:$0xff pattern:$0x73625140]
      %399 = vrot.lane.b32.xlu0 %v397, 118
      %v400 = vpop.permute.xlu0 %399
      %s401 = scalar_lea.vmem [#allocation1], 1
      %402 = vst [vmem:[%s401] ss:$4 sm:$0xff] %v372
      %v403 = vld.sshfl [vmem:[#allocation1] sm:$0xff pattern:$0x73625140]
      %405 = vrot.lane.b32.xlu0 %v403, 118
      %v406 = vpop.permute.xlu0 %405
      %s407 = scalar_lea.vmem [#allocation1], 2
      %408 = vst [vmem:[%s407] ss:$4 sm:$0xff] %v368
      %v409 = vld.sshfl [vmem:[#allocation1] sm:$0xff pattern:$0x73625140]
      %411 = vrot.lane.b32.xlu0 %v409, 119
      %v412 = vpop.permute.xlu0 %411
      %s413 = scalar_lea.vmem [#allocation1], 3
      %414 = vst [vmem:[%s413] ss:$4 sm:$0xff] %v370
      %v415 = vld.sshfl [vmem:[#allocation1] sm:$0xff pattern:$0x73625140]
      %417 = vrot.lane.b32.xlu0 %v415, 118
      %v418 = vpop.permute.xlu0 %417
      %419 = vst [vmem:[#allocation1] ss:$4 sm:$0xff] %v368
      %v420 = vld.sshfl [vmem:[#allocation1] sm:$0xff pattern:$0x73625140]
      %422 = vrot.lane.b32.xlu0 %v420, 118
      %v423 = vpop.permute.xlu0 %422
      %vm424 = vcmask 1041408
      %v426 = vsel %vm424, %v368, %v380
      %vm427 = vcmask 1043456
      %v429 = vsel %vm427, %v426, %v387
      %vm430 = vcmask 1045504
      %v432 = vsel %vm430, %v429, %v394
      %v436 = vsel %vm424, %v400, %v406
      %v438 = vsel %vm427, %v436, %v412
      %v440 = vsel %vm430, %v438, %v418
      %443 = vset.pattern.permute.xlu0 0
      %444 = vperm.xlu0 %443, %v364
      %v445 = vpop.permute.xlu0 %444
      %vm447 = vcmask 293888
      %v449 = vsel %vm447, %v363, 0
      %v452 = vsel %vm424, %v423, 0
      %454 = vmatpush.bf16.msra.mxu0 0
      %455 = vmatpush.bf16.msra.mxu0 0
      %456 = vmatpush.bf16.msra.mxu0 0
      %457 = vmatpush.bf16.msra.mxu0 0
      %458 = vmatpush.bf16.msra.mxu0 0
      %459 = vmatpush.bf16.msra.mxu0 %v452
      %460 = vmatpush.bf16.msra.mxu0 %v440
      %461 = vmatpush.bf16.msra.mxu0 %v432
      %462 = vmatmul.bf16.gmra.mxu0 %v449
      %v463 = vpop.f32.mrf.mxu0
      %v464 = vadd.f32 %v445, %v463
      %v465 = vpop.f32.mrf.mxu0
      %466 = vdwg.mxu0
      %v467 = vmax.f32 %v464, 0.0
      %v468 = vld [vmem:[%s1] sm:$0x1]
      %v470 = vperm.slane %v468, 0
      %v472 = vmul.f32 %v467, %v470
      %v473 = vpack.c.bf16 %v472, %v472
      %475 = vrot.lane.b32.xlu0 %v473, 10
      %v476 = vpop.permute.xlu0 %475
      %vm478 = vcmask 740432
      %479 = vst.msk [vmem:[#allocation2] sm:$0xf] %vm478, %v476
      %v480 = vld [vmem:[%s369] sm:$0x3]
      %v481 = vld [vmem:[%s367] sm:$0x3]
      %v482 = vld [vmem:[%s334] sm:$0x3]
      %v483 = vld [vmem:[%s371] sm:$0x3]
      %s485 = scalar_lea.vmem [#allocation1], 1
      %486 = vst [vmem:[%s485] ss:$4 sm:$0xff] %v481
      %v487 = vld.sshfl [vmem:[#allocation1] sm:$0xff pattern:$0x73625140]
      %s489 = scalar_lea.vmem [#allocation1], 2
      %490 = vst [vmem:[%s489] ss:$4 sm:$0xff] %v480
      %v491 = vld.sshfl [vmem:[#allocation1] sm:$0xff pattern:$0x73625140]
      %493 = vrot.lane.b32.xlu0 %v491, 127
      %v494 = vpop.permute.xlu0 %493
      %s496 = scalar_lea.vmem [#allocation1], 3
      %497 = vst [vmem:[%s496] ss:$4 sm:$0xff] %v482
      %v498 = vld.sshfl [vmem:[#allocation1] sm:$0xff pattern:$0x73625140]
      %500 = vrot.lane.b32.xlu0 %v498, 119
      %v501 = vpop.permute.xlu0 %500
      %503 = vst [vmem:[#allocation1] ss:$4 sm:$0xff] %v483
      %v504 = vld.sshfl [vmem:[#allocation1] sm:$0xff pattern:$0x73625140]
      %506 = vrot.lane.b32.xlu0 %v504, 119
      %v507 = vpop.permute.xlu0 %506
      %s508 = scalar_lea.vmem [#allocation1], 1
      %509 = vst [vmem:[%s508] ss:$4 sm:$0xff] %v482
      %v510 = vld.sshfl [vmem:[#allocation1] sm:$0xff pattern:$0x73625140]
      %512 = vrot.lane.b32.xlu0 %v510, 118
      %v513 = vpop.permute.xlu0 %512
      %s514 = scalar_lea.vmem [#allocation1], 2
      %515 = vst [vmem:[%s514] ss:$4 sm:$0xff] %v480
      %v516 = vld.sshfl [vmem:[#allocation1] sm:$0xff pattern:$0x73625140]
      %518 = vrot.lane.b32.xlu0 %v516, 119
      %v519 = vpop.permute.xlu0 %518
      %s520 = scalar_lea.vmem [#allocation1], 3
      %521 = vst [vmem:[%s520] ss:$4 sm:$0xff] %v481
      %v522 = vld.sshfl [vmem:[#allocation1] sm:$0xff pattern:$0x73625140]
      %524 = vrot.lane.b32.xlu0 %v522, 119
      %v525 = vpop.permute.xlu0 %524
      %526 = vst [vmem:[#allocation1] ss:$4 sm:$0xff] %v480
      %v527 = vld.sshfl [vmem:[#allocation1] sm:$0xff pattern:$0x73625140]
      %529 = vrot.lane.b32.xlu0 %v527, 118
      %v530 = vpop.permute.xlu0 %529
      %v531 = vsel %vm424, %v480, %v487
      %v533 = vsel %vm427, %v531, %v494
      %v535 = vsel %vm430, %v533, %v501
      %v538 = vsel %vm424, %v507, %v513
      %v540 = vsel %vm427, %v538, %v519
      %v542 = vsel %vm430, %v540, %v525
      %545 = vrot.lane.b32.xlu0 %v535, 127
      %v546 = vpop.permute.xlu0 %545
      %547 = vrot.lane.b32.xlu0 %v542, 127
      %v548 = vpop.permute.xlu0 %547
      %549 = vrot.lane.b32.xlu0 %v530, 127
      %v550 = vpop.permute.xlu0 %549
      %v554 = vsel %vm424, %v550, 0
      %556 = vmatpush.bf16.msra.mxu0 0
      %557 = vmatpush.bf16.msra.mxu0 0
      %558 = vmatpush.bf16.msra.mxu0 0
      %559 = vmatpush.bf16.msra.mxu0 0
      %560 = vmatpush.bf16.msra.mxu0 0
      %561 = vmatpush.bf16.msra.mxu0 %v554
      %562 = vmatpush.bf16.msra.mxu0 %v548
      %563 = vmatpush.bf16.msra.mxu0 %v546
      %564 = vmatmul.bf16.gmra.mxu0 %v449
      %v565 = vpop.f32.mrf.mxu0
      %v566 = vadd.f32 %v445, %v565
      %v567 = vpop.f32.mrf.mxu0
      %568 = vdwg.mxu0
      %v569 = vmax.f32 %v566, 0.0
      %s570 = scalar_lea.vmem %s1, 1
      %v571 = vld [vmem:[%s570] sm:$0x1]
      %v573 = vperm.slane %v571, 0
      %v575 = vmul.f32 %v569, %v573
      %v576 = vpack.c.bf16 %v575, %v575
      %578 = vrot.lane.b32.xlu0 %v576, 10
      %v579 = vpop.permute.xlu0 %578
      %s581 = scalar_lea.vmem [#allocation2], 4
      %582 = vst.msk [vmem:[%s581] sm:$0xf] %vm478, %v579
      %v583 = vld [vmem:[%s371] sm:$0x3]
      %v584 = vld [vmem:[%s334] sm:$0x3]
      %v585 = vld [vmem:[%s367] sm:$0x3]
      %v586 = vld [vmem:[%s369] sm:$0x3]
      %s588 = scalar_lea.vmem [#allocation1], 1
      %589 = vst [vmem:[%s588] ss:$4 sm:$0xff] %v584
      %v590 = vld.sshfl [vmem:[#allocation1] sm:$0xff pattern:$0x73625140]
      %592 = vrot.lane.b32.xlu0 %v590, 127
      %v593 = vpop.permute.xlu0 %592
      %s595 = scalar_lea.vmem [#allocation1], 2
      %596 = vst [vmem:[%s595] ss:$4 sm:$0xff] %v583
      %v597 = vld.sshfl [vmem:[#allocation1] sm:$0xff pattern:$0x73625140]
      %599 = vrot.lane.b32.xlu0 %v597, 127
      %v600 = vpop.permute.xlu0 %599
      %s602 = scalar_lea.vmem [#allocation1], 3
      %603 = vst [vmem:[%s602] ss:$4 sm:$0xff] %v585
      %v604 = vld.sshfl [vmem:[#allocation1] sm:$0xff pattern:$0x73625140]
      %606 = vst [vmem:[#allocation1] ss:$4 sm:$0xff] %v586
      %v607 = vld.sshfl [vmem:[#allocation1] sm:$0xff pattern:$0x73625140]
      %609 = vrot.lane.b32.xlu0 %v607, 127
      %v610 = vpop.permute.xlu0 %609
      %s611 = scalar_lea.vmem [#allocation1], 1
      %612 = vst [vmem:[%s611] ss:$4 sm:$0xff] %v585
      %v613 = vld.sshfl [vmem:[#allocation1] sm:$0xff pattern:$0x73625140]
      %615 = vrot.lane.b32.xlu0 %v613, 127
      %v616 = vpop.permute.xlu0 %615
      %s617 = scalar_lea.vmem [#allocation1], 2
      %618 = vst [vmem:[%s617] ss:$4 sm:$0xff] %v583
      %v619 = vld.sshfl [vmem:[#allocation1] sm:$0xff pattern:$0x73625140]
      %621 = vrot.lane.b32.xlu0 %v619, 119
      %v622 = vpop.permute.xlu0 %621
      %s623 = scalar_lea.vmem [#allocation1], 3
      %624 = vst [vmem:[%s623] ss:$4 sm:$0xff] %v584
      %v625 = vld.sshfl [vmem:[#allocation1] sm:$0xff pattern:$0x73625140]
      %627 = vrot.lane.b32.xlu0 %v625, 118
      %v628 = vpop.permute.xlu0 %627
      %629 = vst [vmem:[#allocation1] ss:$4 sm:$0xff] %v583
      %v630 = vld.sshfl [vmem:[#allocation1] sm:$0xff pattern:$0x73625140]
      %632 = vrot.lane.b32.xlu0 %v630, 118
      %v633 = vpop.permute.xlu0 %632
      %v635 = vsel %vm424, %v583, %v593
      %v637 = vsel %vm427, %v635, %v600
      %v638 = vsel %vm430, %v637, %v604
      %v641 = vsel %vm424, %v610, %v616
      %v643 = vsel %vm427, %v641, %v622
      %v645 = vsel %vm430, %v643, %v628
      %648 = vrot.lane.b32.xlu0 %v638, 119
      %v649 = vpop.permute.xlu0 %648
      %650 = vrot.lane.b32.xlu0 %v645, 119
      %v651 = vpop.permute.xlu0 %650
      %652 = vrot.lane.b32.xlu0 %v633, 119
      %v653 = vpop.permute.xlu0 %652
      %v657 = vsel %vm424, %v653, 0
      %659 = vmatpush.bf16.msra.mxu0 0
      %660 = vmatpush.bf16.msra.mxu0 0
      %661 = vmatpush.bf16.msra.mxu0 0
      %662 = vmatpush.bf16.msra.mxu0 0
      %663 = vmatpush.bf16.msra.mxu0 0
      %664 = vmatpush.bf16.msra.mxu0 %v657
      %665 = vmatpush.bf16.msra.mxu0 %v651
      %666 = vmatpush.bf16.msra.mxu0 %v649
      %667 = vmatmul.bf16.gmra.mxu0 %v449
      %v668 = vpop.f32.mrf.mxu0
      %v669 = vadd.f32 %v445, %v668
      %v670 = vpop.f32.mrf.mxu0
      %671 = vdwg.mxu0
      %v672 = vmax.f32 %v669, 0.0
      %s673 = scalar_lea.vmem %s1, 2
      %v674 = vld [vmem:[%s673] sm:$0x1]
      %v676 = vperm.slane %v674, 0
      %v678 = vmul.f32 %v672, %v676
      %v679 = vpack.c.bf16 %v678, %v678
      %681 = vrot.lane.b32.xlu0 %v679, 10
      %v682 = vpop.permute.xlu0 %681
      %s684 = scalar_lea.vmem [#allocation2], 8
      %685 = vst.msk [vmem:[%s684] sm:$0xf] %vm478, %v682
      %v686 = vld [vmem:[%s334] sm:$0x3]
      %v687 = vld [vmem:[%s371] sm:$0x3]
      %v688 = vld [vmem:[%s369] sm:$0x3]
      %v689 = vld [vmem:[%s367] sm:$0x3]
      %s691 = scalar_lea.vmem [#allocation1], 1
      %692 = vst [vmem:[%s691] ss:$4 sm:$0xff] %v687
      %v693 = vld.sshfl [vmem:[#allocation1] sm:$0xff pattern:$0x73625140]
      %s695 = scalar_lea.vmem [#allocation1], 2
      %696 = vst [vmem:[%s695] ss:$4 sm:$0xff] %v686
      %v697 = vld.sshfl [vmem:[#allocation1] sm:$0xff pattern:$0x73625140]
      %699 = vrot.lane.b32.xlu0 %v697, 127
      %v700 = vpop.permute.xlu0 %699
      %s702 = scalar_lea.vmem [#allocation1], 3
      %703 = vst [vmem:[%s702] ss:$4 sm:$0xff] %v688
      %v704 = vld.sshfl [vmem:[#allocation1] sm:$0xff pattern:$0x73625140]
      %s705 = scalar_lea.vmem [#allocation1], 1
      %706 = vst [vmem:[%s705] ss:$4 sm:$0xff] %v688
      %v707 = vld.sshfl [vmem:[#allocation1] sm:$0xff pattern:$0x73625140]
      %709 = vrot.lane.b32.xlu0 %v707, 127
      %v710 = vpop.permute.xlu0 %709
      %s711 = scalar_lea.vmem [#allocation1], 2
      %712 = vst [vmem:[%s711] ss:$4 sm:$0xff] %v686
      %v713 = vld.sshfl [vmem:[#allocation1] sm:$0xff pattern:$0x73625140]
      %715 = vrot.lane.b32.xlu0 %v713, 119
      %v716 = vpop.permute.xlu0 %715
      %s717 = scalar_lea.vmem [#allocation1], 3
      %718 = vst [vmem:[%s717] ss:$4 sm:$0xff] %v687
      %v719 = vld.sshfl [vmem:[#allocation1] sm:$0xff pattern:$0x73625140]
      %721 = vrot.lane.b32.xlu0 %v719, 119
      %v722 = vpop.permute.xlu0 %721
      %723 = vst [vmem:[#allocation1] ss:$4 sm:$0xff] %v686
      %v724 = vld.sshfl [vmem:[#allocation1] sm:$0xff pattern:$0x73625140]
      %726 = vrot.lane.b32.xlu0 %v724, 118
      %v727 = vpop.permute.xlu0 %726
      %v728 = vsel %vm424, %v686, %v693
      %v730 = vsel %vm427, %v728, %v700
      %v731 = vsel %vm430, %v730, %v704
      %v734 = vsel %vm424, %v689, %v710
      %v736 = vsel %vm427, %v734, %v716
      %v738 = vsel %vm430, %v736, %v722
      %741 = vrot.lane.b32.xlu0 %v731, 118
      %v742 = vpop.permute.xlu0 %741
      %743 = vrot.lane.b32.xlu0 %v738, 118
      %v744 = vpop.permute.xlu0 %743
      %745 = vrot.lane.b32.xlu0 %v727, 118
      %v746 = vpop.permute.xlu0 %745
      %v750 = vsel %vm424, %v746, 0
      %752 = vmatpush.bf16.msra.mxu0 0
      %753 = vmatpush.bf16.msra.mxu0 0
      %754 = vmatpush.bf16.msra.mxu0 0
      %755 = vmatpush.bf16.msra.mxu0 0
      %756 = vmatpush.bf16.msra.mxu0 0
      %757 = vmatpush.bf16.msra.mxu0 %v750
      %758 = vmatpush.bf16.msra.mxu0 %v744
      %759 = vmatpush.bf16.msra.mxu0 %v742
      %760 = vmatmul.bf16.gmra.mxu0 %v449
      %v761 = vpop.f32.mrf.mxu0
      %v762 = vadd.f32 %v445, %v761
      %v763 = vpop.f32.mrf.mxu0
      %764 = vdwg.mxu0
      %v765 = vmax.f32 %v762, 0.0
      %s766 = scalar_lea.vmem %s1, 3
      %v767 = vld [vmem:[%s766] sm:$0x1]
      %v769 = vperm.slane %v767, 0
      %v771 = vmul.f32 %v765, %v769
      %v772 = vpack.c.bf16 %v771, %v771
      %774 = vrot.lane.b32.xlu0 %v772, 10
      %v775 = vpop.permute.xlu0 %774
      %s777 = scalar_lea.vmem [#allocation2], 12
      %778 = vst.msk [vmem:[%s777] sm:$0xf] %vm478, %v775
      %v779 = vld [vmem:[%s777] sm:$0xf]
      %v780 = vld [vmem:[%s684] sm:$0xf]
      %v781 = vld [vmem:[%s581] sm:$0xf]
      %v782 = vld [vmem:[#allocation2] sm:$0xf]
      %v784 = vunpack.c.l.b16 %v780
      %v785 = vpack.c.b16 %v784, %v784
      %786 = vrot.lane.b32.xlu0 %v785, 127
      %v787 = vpop.permute.xlu0 %786
      %v789 = vunpack.c.l.b16 %v779
      %v790 = vpack.c.b16 %v789, %v789
      %791 = vrot.lane.b32.xlu0 %v790, 127
      %v792 = vpop.permute.xlu0 %791
      %v794 = vunpack.c.l.b16 %v781
      %v795 = vpack.c.b16 %v794, %v794
      %796 = vrot.lane.b32.xlu0 %v795, 119
      %v797 = vpop.permute.xlu0 %796
      %v799 = vunpack.c.l.b16 %v782
      %v800 = vpack.c.b16 %v799, %v799
      %801 = vrot.lane.b32.xlu0 %v800, 118
      %v802 = vpop.permute.xlu0 %801
      %803 = vrot.lane.b32.xlu0 %v795, 118
      %v804 = vpop.permute.xlu0 %803
      %805 = vrot.lane.b32.xlu0 %v790, 119
      %v806 = vpop.permute.xlu0 %805
      %807 = vrot.lane.b32.xlu0 %v785, 118
      %v808 = vpop.permute.xlu0 %807
      %809 = vrot.lane.b32.xlu0 %v790, 118
      %v810 = vpop.permute.xlu0 %809
      %v813 = vsel %vm427, %v779, %v787
      %v817 = vsel %vm427, %v792, %v797
      %v821 = vsel %vm427, %v802, %v804
      %v825 = vsel %vm427, %v806, %v808
      %828 = vset.pattern.permute.xlu0 0
      %829 = vperm.xlu0 %828, %v366
      %v830 = vpop.permute.xlu0 %829
      %vm832 = vcmask 588800
      %v834 = vsel %vm832, %v365, 0
      %v837 = vsel %vm427, %v810, 0
      %839 = vmatpush.bf16.msra.mxu0 0
      %840 = vmatpush.bf16.msra.mxu0 0
      %841 = vmatpush.bf16.msra.mxu0 0
      %842 = vmatpush.bf16.msra.mxu0 %v837
      %843 = vmatpush.bf16.msra.mxu0 %v825
      %844 = vmatpush.bf16.msra.mxu0 %v821
      %845 = vmatpush.bf16.msra.mxu0 %v817
      %846 = vmatpush.bf16.msra.mxu0 %v813
      %847 = vmatmul.bf16.gmra.mxu0 %v834
      %v848 = vpop.f32.mrf.mxu0
      %v849 = vadd.f32 %v830, %v848
      %v850 = vpop.f32.mrf.mxu0
      %851 = vdwg.mxu0
      %v852 = vmax.f32 %v849, 0.0
      %v853 = vld [vmem:[%s1] sm:$0x1]
      %v855 = vperm.slane %v853, 0
      %v857 = vmul.f32 %v852, %v855
      %vm858 = vcmask 662528
      %859 = vst.msk [vmem:[%s339] sm:$0xff] %vm858, %v857
      %v860 = vpack.c.bf16 %v857, %v857
      %862 = vrot.lane.b32.xlu0 %v860, 10
      %v863 = vpop.permute.xlu0 %862
      %865 = vst.msk [vmem:[#allocation3] sm:$0xf] %vm478, %v863
      %v866 = vld [vmem:[%s684] sm:$0xf]
      %v867 = vld [vmem:[%s777] sm:$0xf]
      %v868 = vld [vmem:[#allocation2] sm:$0xf]
      %v869 = vld [vmem:[%s581] sm:$0xf]
      %v871 = vunpack.c.l.b16 %v867
      %v872 = vpack.c.b16 %v871, %v871
      %v874 = vunpack.c.l.b16 %v866
      %v875 = vpack.c.b16 %v874, %v874
      %876 = vrot.lane.b32.xlu0 %v875, 127
      %v877 = vpop.permute.xlu0 %876
      %v879 = vunpack.c.l.b16 %v868
      %v880 = vpack.c.b16 %v879, %v879
      %881 = vrot.lane.b32.xlu0 %v880, 119
      %v882 = vpop.permute.xlu0 %881
      %v884 = vunpack.c.l.b16 %v869
      %v885 = vpack.c.b16 %v884, %v884
      %886 = vrot.lane.b32.xlu0 %v885, 119
      %v887 = vpop.permute.xlu0 %886
      %888 = vrot.lane.b32.xlu0 %v880, 118
      %v889 = vpop.permute.xlu0 %888
      %890 = vrot.lane.b32.xlu0 %v875, 119
      %v891 = vpop.permute.xlu0 %890
      %892 = vrot.lane.b32.xlu0 %v872, 119
      %v893 = vpop.permute.xlu0 %892
      %894 = vrot.lane.b32.xlu0 %v875, 118
      %v895 = vpop.permute.xlu0 %894
      %v898 = vsel %vm427, %v866, %v872
      %v901 = vsel %vm427, %v877, %v882
      %v904 = vsel %vm427, %v887, %v889
      %v907 = vsel %vm427, %v891, %v893
      %912 = vrot.lane.b32.xlu0 %v898, 127
      %v913 = vpop.permute.xlu0 %912
      %914 = vrot.lane.b32.xlu0 %v901, 127
      %v915 = vpop.permute.xlu0 %914
      %916 = vrot.lane.b32.xlu0 %v904, 127
      %v917 = vpop.permute.xlu0 %916
      %918 = vrot.lane.b32.xlu0 %v907, 127
      %v919 = vpop.permute.xlu0 %918
      %920 = vrot.lane.b32.xlu0 %v895, 127
      %v921 = vpop.permute.xlu0 %920
      %v927 = vsel %vm427, %v921, 0
      %929 = vmatpush.bf16.msra.mxu0 0
      %930 = vmatpush.bf16.msra.mxu0 0
      %931 = vmatpush.bf16.msra.mxu0 0
      %932 = vmatpush.bf16.msra.mxu0 %v927
      %933 = vmatpush.bf16.msra.mxu0 %v919
      %934 = vmatpush.bf16.msra.mxu0 %v917
      %935 = vmatpush.bf16.msra.mxu0 %v915
      %936 = vmatpush.bf16.msra.mxu0 %v913
      %937 = vmatmul.bf16.gmra.mxu0 %v834
      %v938 = vpop.f32.mrf.mxu0
      %v939 = vadd.f32 %v830, %v938
      %v940 = vpop.f32.mrf.mxu0
      %941 = vdwg.mxu0
      %v942 = vmax.f32 %v939, 0.0
      %v943 = vld [vmem:[%s570] sm:$0x1]
      %v945 = vperm.slane %v943, 0
      %v947 = vmul.f32 %v942, %v945
      %s948 = scalar_lea.vmem %s339, 8
      %949 = vst.msk [vmem:[%s948] sm:$0xff] %vm858, %v947
      %v950 = vpack.c.bf16 %v947, %v947
      %952 = vrot.lane.b32.xlu0 %v950, 10
      %v953 = vpop.permute.xlu0 %952
      %s955 = scalar_lea.vmem [#allocation3], 4
      %956 = vst.msk [vmem:[%s955] sm:$0xf] %vm478, %v953
      %v957 = vld [vmem:[%s581] sm:$0xf]
      %v958 = vld [vmem:[#allocation2] sm:$0xf]
      %v959 = vld [vmem:[%s777] sm:$0xf]
      %v960 = vld [vmem:[%s684] sm:$0xf]
      %v962 = vunpack.c.l.b16 %v958
      %v963 = vpack.c.b16 %v962, %v962
      %964 = vrot.lane.b32.xlu0 %v963, 127
      %v965 = vpop.permute.xlu0 %964
      %v967 = vunpack.c.l.b16 %v957
      %v968 = vpack.c.b16 %v967, %v967
      %969 = vrot.lane.b32.xlu0 %v968, 127
      %v970 = vpop.permute.xlu0 %969
      %v972 = vunpack.c.l.b16 %v959
      %v973 = vpack.c.b16 %v972, %v972
      %v975 = vunpack.c.l.b16 %v960
      %v976 = vpack.c.b16 %v975, %v975
      %977 = vrot.lane.b32.xlu0 %v976, 127
      %v978 = vpop.permute.xlu0 %977
      %979 = vrot.lane.b32.xlu0 %v973, 127
      %v980 = vpop.permute.xlu0 %979
      %981 = vrot.lane.b32.xlu0 %v968, 119
      %v982 = vpop.permute.xlu0 %981
      %983 = vrot.lane.b32.xlu0 %v963, 118
      %v984 = vpop.permute.xlu0 %983
      %985 = vrot.lane.b32.xlu0 %v968, 118
      %v986 = vpop.permute.xlu0 %985
      %v989 = vsel %vm427, %v957, %v965
      %v992 = vsel %vm427, %v970, %v973
      %v995 = vsel %vm427, %v978, %v980
      %v998 = vsel %vm427, %v982, %v984
      %1003 = vrot.lane.b32.xlu0 %v989, 119
      %v1004 = vpop.permute.xlu0 %1003
      %1005 = vrot.lane.b32.xlu0 %v992, 119
      %v1006 = vpop.permute.xlu0 %1005
      %1007 = vrot.lane.b32.xlu0 %v995, 119
      %v1008 = vpop.permute.xlu0 %1007
      %1009 = vrot.lane.b32.xlu0 %v998, 119
      %v1010 = vpop.permute.xlu0 %1009
      %1011 = vrot.lane.b32.xlu0 %v986, 119
      %v1012 = vpop.permute.xlu0 %1011
      %v1018 = vsel %vm427, %v1012, 0
      %1020 = vmatpush.bf16.msra.mxu0 0
      %1021 = vmatpush.bf16.msra.mxu0 0
      %1022 = vmatpush.bf16.msra.mxu0 0
      %1023 = vmatpush.bf16.msra.mxu0 %v1018
      %1024 = vmatpush.bf16.msra.mxu0 %v1010
      %1025 = vmatpush.bf16.msra.mxu0 %v1008
      %1026 = vmatpush.bf16.msra.mxu0 %v1006
      %1027 = vmatpush.bf16.msra.mxu0 %v1004
      %1028 = vmatmul.bf16.gmra.mxu0 %v834
      %v1029 = vpop.f32.mrf.mxu0
      %v1030 = vadd.f32 %v830, %v1029
      %v1031 = vpop.f32.mrf.mxu0
      %1032 = vdwg.mxu0
      %v1033 = vmax.f32 %v1030, 0.0
      %v1034 = vld [vmem:[%s673] sm:$0x1]
      %v1036 = vperm.slane %v1034, 0
      %v1038 = vmul.f32 %v1033, %v1036
      %s1039 = scalar_lea.vmem %s339, 16
      %1040 = vst.msk [vmem:[%s1039] sm:$0xff] %vm858, %v1038
      %v1041 = vpack.c.bf16 %v1038, %v1038
      %1043 = vrot.lane.b32.xlu0 %v1041, 10
      %v1044 = vpop.permute.xlu0 %1043
      %s1046 = scalar_lea.vmem [#allocation3], 8
      %1047 = vst.msk [vmem:[%s1046] sm:$0xf] %vm478, %v1044
      %v1048 = vld [vmem:[#allocation2] sm:$0xf]
      %v1049 = vld [vmem:[%s581] sm:$0xf]
      %v1050 = vld [vmem:[%s684] sm:$0xf]
      %v1051 = vld [vmem:[%s777] sm:$0xf]
      %v1053 = vunpack.c.l.b16 %v1049
      %v1054 = vpack.c.b16 %v1053, %v1053
      %v1056 = vunpack.c.l.b16 %v1048
      %v1057 = vpack.c.b16 %v1056, %v1056
      %1058 = vrot.lane.b32.xlu0 %v1057, 127
      %v1059 = vpop.permute.xlu0 %1058
      %v1061 = vunpack.c.l.b16 %v1050
      %v1062 = vpack.c.b16 %v1061, %v1061
      %1063 = vrot.lane.b32.xlu0 %v1062, 127
      %v1064 = vpop.permute.xlu0 %1063
      %1065 = vrot.lane.b32.xlu0 %v1057, 119
      %v1066 = vpop.permute.xlu0 %1065
      %1067 = vrot.lane.b32.xlu0 %v1054, 119
      %v1068 = vpop.permute.xlu0 %1067
      %1069 = vrot.lane.b32.xlu0 %v1057, 118
      %v1070 = vpop.permute.xlu0 %1069
      %v1073 = vsel %vm427, %v1048, %v1054
      %v1076 = vsel %vm427, %v1059, %v1062
      %v1079 = vsel %vm427, %v1051, %v1064
      %v1082 = vsel %vm427, %v1066, %v1068
      %1087 = vrot.lane.b32.xlu0 %v1073, 118
      %v1088 = vpop.permute.xlu0 %1087
      %1089 = vrot.lane.b32.xlu0 %v1076, 118
      %v1090 = vpop.permute.xlu0 %1089
      %1091 = vrot.lane.b32.xlu0 %v1079, 118
      %v1092 = vpop.permute.xlu0 %1091
      %1093 = vrot.lane.b32.xlu0 %v1082, 118
      %v1094 = vpop.permute.xlu0 %1093
      %1095 = vrot.lane.b32.xlu0 %v1070, 118
      %v1096 = vpop.permute.xlu0 %1095
      %v1102 = vsel %vm427, %v1096, 0
      %1104 = vmatpush.bf16.msra.mxu0 0
      %1105 = vmatpush.bf16.msra.mxu0 0
      %1106 = vmatpush.bf16.msra.mxu0 0
      %1107 = vmatpush.bf16.msra.mxu0 %v1102
      %1108 = vmatpush.bf16.msra.mxu0 %v1094
      %1109 = vmatpush.bf16.msra.mxu0 %v1092
      %1110 = vmatpush.bf16.msra.mxu0 %v1090
      %1111 = vmatpush.bf16.msra.mxu0 %v1088
      %1112 = vmatmul.bf16.gmra.mxu0 %v834
      %v1113 = vpop.f32.mrf.mxu0
      %v1114 = vadd.f32 %v830, %v1113
      %v1115 = vpop.f32.mrf.mxu0
      %1116 = vdwg.mxu0
      %v1117 = vmax.f32 %v1114, 0.0
      %v1118 = vld [vmem:[%s766] sm:$0x1]
      %v1120 = vperm.slane %v1118, 0
      %v1122 = vmul.f32 %v1117, %v1120
      %s1123 = scalar_lea.vmem %s339, 24
      %1124 = vst.msk [vmem:[%s1123] sm:$0xff] %vm858, %v1122
      %v1125 = vpack.c.bf16 %v1122, %v1122
      %1127 = vrot.lane.b32.xlu0 %v1125, 10
      %v1128 = vpop.permute.xlu0 %1127
      %s1130 = scalar_lea.vmem [#allocation3], 12
      %1131 = vst.msk [vmem:[%s1130] sm:$0xf] %vm478, %v1128
      %v1132 = vld [vmem:[#allocation3] sm:$0xf]
      %v1133 = vld [vmem:[%s955] sm:$0xf]
      %v1134 = vld [vmem:[%s1046] sm:$0xf]
      %v1135 = vld [vmem:[%s1130] sm:$0xf]
      %v1137 = vunpack.c.l.b16 %v1133
      %v1138 = vpack.c.b16 %v1137, %v1137
      %v1140 = vunpack.c.l.b16 %v1132
      %v1141 = vpack.c.b16 %v1140, %v1140
      %1142 = vrot.lane.b32.xlu0 %v1141, 127
      %v1143 = vpop.permute.xlu0 %1142
      %v1145 = vunpack.c.l.b16 %v1134
      %v1146 = vpack.c.b16 %v1145, %v1145
      %1147 = vrot.lane.b32.xlu0 %v1146, 127
      %v1148 = vpop.permute.xlu0 %1147
      %1149 = vrot.lane.b32.xlu0 %v1141, 119
      %v1150 = vpop.permute.xlu0 %1149
      %1151 = vrot.lane.b32.xlu0 %v1138, 119
      %v1152 = vpop.permute.xlu0 %1151
      %1153 = vrot.lane.b32.xlu0 %v1141, 118
      %v1154 = vpop.permute.xlu0 %1153
      %v1157 = vsel %vm427, %v1132, %v1138
      %v1160 = vsel %vm427, %v1143, %v1146
      %v1163 = vsel %vm427, %v1135, %v1148
      %v1166 = vsel %vm427, %v1150, %v1152
      %v1167 = vld [vmem:[%s6] sm:$0xf]
      %v1168 = vld [vmem:[%s7] sm:$0xff]
      %1170 = vset.pattern.permute.xlu0 0
      %1171 = vperm.xlu0 %1170, %v1168
      %v1172 = vpop.permute.xlu0 %1171
      %1178 = vrot.lane.b32.xlu0 %v1157, 118
      %v1179 = vpop.permute.xlu0 %1178
      %1180 = vrot.lane.b32.xlu0 %v1160, 118
      %v1181 = vpop.permute.xlu0 %1180
      %1182 = vrot.lane.b32.xlu0 %v1163, 118
      %v1183 = vpop.permute.xlu0 %1182
      %1184 = vrot.lane.b32.xlu0 %v1166, 118
      %v1185 = vpop.permute.xlu0 %1184
      %1186 = vrot.lane.b32.xlu0 %v1154, 118
      %v1187 = vpop.permute.xlu0 %1186
      %v1193 = vsel %vm832, %v1167, 0
      %v1196 = vsel %vm427, %v1187, 0
      %1198 = vmatpush.bf16.msra.mxu0 0
      %1199 = vmatpush.bf16.msra.mxu0 0
      %1200 = vmatpush.bf16.msra.mxu0 0
      %1201 = vmatpush.bf16.msra.mxu0 %v1196
      %1202 = vmatpush.bf16.msra.mxu0 %v1185
      %1203 = vmatpush.bf16.msra.mxu0 %v1183
      %1204 = vmatpush.bf16.msra.mxu0 %v1181
      %1205 = vmatpush.bf16.msra.mxu0 %v1179
      %1206 = vmatmul.bf16.gmra.mxu0 %v1193
      %v1207 = vpop.f32.mrf.mxu0
      %v1208 = vadd.f32 %v1172, %v1207
      %v1209 = vpop.f32.mrf.mxu0
      %1210 = vdwg.mxu0
      %v1211 = vmax.f32 %v1208, 0.0
      %1212 = vst.msk [vmem:[%s343] sm:$0xff] %vm832, %v1211
      %p1213 = scmp.lt.s32.totalorder %s21, 1
      %s1214 = scalar_select %p1213, %s21, 1
      %s1215 = smul.addr %s1214, 4
      %s1216 = smul.addr %s1215, 8
      %s1217 = scalar_lea.vmem %s8, %s1216
      %p1218 = scmp.lt.s32.totalorder %s21, 1
      %s1219 = scalar_select %p1218, %s21, 1
      %s1220 = smul.addr %s1219, 8
      %s1221 = scalar_lea.vmem %s9, %s1220
      // Predicated region
      $region53: #{downsample_forward.1} parent=51 // pred_check
        %p1222 = pneg %p212
      $region54: #{downsample_forward.1} parent=51 // pred_check_branch
        %1224 = sbr.rel (%p1222) target = $region56
      $region55: #{downsample_forward.1} parent=51 // pred_region
        _
      $region56: #{downsample_forward.1} parent=51 // pred_fallthru
        _
      // Predicated region
      $region57: #{downsample_forward.1} parent=51 // pred_check
        %p1225 = pneg %p238
      $region58: #{downsample_forward.1} parent=51 // pred_check_branch
        %1227 = sbr.rel (%p1225) target = $region60
      $region59: #{downsample_forward.1} parent=51 // pred_region
        _
      $region60: #{downsample_forward.1} parent=51 // pred_fallthru
        _
    $region52: #{downsample_forward.1} parent=5 // pred_fallthru
      _
    %p1228 = scmp.le.s32.totalorder 2, %s16
    // Predicated region
    $region61: #{downsample_forward.1} parent=5 // pred_check
      %p1229 = pneg %p1228
    $region62: #{downsample_forward.1} parent=5 // pred_check_branch
      %1231 = sbr.rel (%p1229) target = $region64
    $region63: #{downsample_forward.1} parent=5 // pred_region
      %s1232 = ssub.s32 %s16, 2
      // Predicated region
      $region65: #{downsample_forward.1} parent=63 // pred_check
        %p1233 = pneg %p218
      $region66: #{downsample_forward.1} parent=63 // pred_check_branch
        %1235 = sbr.rel (%p1233) target = $region68
      $region67: #{downsample_forward.1} parent=63 // pred_region
        %p1236 = scmp.lt.s32.totalorder %s22, 1
        %s1237 = scalar_select %p1236, %s22, 1
        %s1238 = smul.addr %s1237, 4
        %s1239 = smul.addr %s1238, 8
        %s1240 = scalar_lea.vmem %s8, %s1239
      $region68: #{downsample_forward.1} parent=63 // pred_fallthru
        _
      // Predicated region
      $region69: #{downsample_forward.1} parent=63 // pred_check
        %p1241 = pneg %p244
      $region70: #{downsample_forward.1} parent=63 // pred_check_branch
        %1243 = sbr.rel (%p1241) target = $region72
      $region71: #{downsample_forward.1} parent=63 // pred_region
        %p1244 = scmp.lt.s32.totalorder %s22, 1
        %s1245 = scalar_select %p1244, %s22, 1
        %s1246 = smul.addr %s1245, 8
        %s1247 = scalar_lea.vmem %s9, %s1246
      $region72: #{downsample_forward.1} parent=63 // pred_fallthru
        _
    $region64: #{downsample_forward.1} parent=5 // pred_fallthru
      _
  $region6: #{downsample_forward.1} parent=0 // loop_footer
    %s20 = sadd.s32 1, %s16
  $region7: #{downsample_forward.1} parent=0 // loop_footer_branch
    %15 = sbr.rel target = $region3
  $region8: #{downsample_forward.1} parent=0 // loop_exit
    _

</llo_original>
